<compile_context>
chip_gen: v7x
topology: tpu7x:2x2x1
jax: 0.10.0
libtpu: 0.0.40
codegen_flags: <defaults>
</compile_context>

<pallas_src>
import math

import numpy as np
import jax
import jax.numpy as jnp
from jax.experimental import pallas as pl
from jax.experimental.pallas import tpu as pltpu

# ---------------------------------------------------------------------------
# Problem sizes (consistent with the module's forward)
# ---------------------------------------------------------------------------
D = 8            # input_size (dim of z / w)
C = 8            # cond_label_size (dim of y / u / eps)
COND = D + C     # conditioner input dim for the density MLPs (16)
H = 2 * COND     # hidden width of each single MLP (32)
HH = 2 * H       # hidden width of a fused shift/log-scale MLP pair (64)

B_TOTAL = 128    # total batch rows per call (multiple of TILE_B)
TILE_B = 64      # rows per grid step (multiple of 8; M is ~free on the MXU)

assert D == C, "lane-8 log_weight layout assumes input_size == cond_label_size"
assert B_TOTAL % TILE_B == 0 and TILE_B % 8 == 0

# ---------------------------------------------------------------------------
# Row offsets inside the single packed parameter slab (all multiples of 8).
# Slab width = HH = 64 lanes.
# ---------------------------------------------------------------------------
R_W1Z = 0      # (8, 64)   fused r layer-1, z row-block
R_W1Y = 8      # (8, 64)   fused r layer-1, y row-block
R_B1  = 16     # (1, 64)   fused r bias-1 (rows 17:24 padding)
R_W2  = 24     # (64, 64)  fused r layer-2 (block diagonal)
R_B2  = 88     # (1, 64)
R_W3  = 96     # (64, 64)  fused r layer-3 (cols 0:16 valid, rest zero)
R_B3  = 160    # (1, 64)   (cols 0:16 valid)
Q_W1W = 168    # (8, 64)   fused q layer-1, w row-block
Q_W1Y = 176    # (8, 64)   fused q layer-1, y row-block
Q_B1  = 184    # (1, 64)
Q_W2  = 192    # (64, 64)
Q_B2  = 256    # (1, 64)
Q_W3  = 264    # (64, 64)  (cols 0:16 valid)
Q_B3  = 328    # (1, 64)   (cols 0:16 valid)
BIJ_W = 336    # (8, 64)   cols 0:16 = [W_s | W_t]
BIJ_B = 344    # (1, 64)   cols 0:16 = [b_s | b_t]
P_ROWS = 352


# ---------------------------------------------------------------------------
# Fused Pallas kernel: one batch-tile of CIF_step.forward
# ---------------------------------------------------------------------------
def cif_step_kernel(z_ref, y_ref, eps_ref, p_ref, out_ref):
    z = z_ref[...]                           # (TB, 8)
    y = y_ref[...]                           # (TB, 8)
    eps = eps_ref[...]                       # (TB, 8)
    p = p_ref                                # (352, 64) VMEM-resident slab

    # ---- r_u_given_z: fused shift/log-scale MLP on cat([z, y], -1) ----
    # layer-1 as two split dots (no activation concat needed).
    h = (jnp.dot(z, p[R_W1Z:R_W1Z + D, :], preferred_element_type=jnp.float32)
         + jnp.dot(y, p[R_W1Y:R_W1Y + C, :], preferred_element_type=jnp.float32)
         + p[R_B1:R_B1 + 1, :])
    h = jnp.maximum(h, 0.0)
    h = jnp.dot(h, p[R_W2:R_W2 + HH, :],
                preferred_element_type=jnp.float32) + p[R_B2:R_B2 + 1, :]
    h = jnp.maximum(h, 0.0)
    r_out = jnp.dot(h, p[R_W3:R_W3 + HH, :],
                    preferred_element_type=jnp.float32) + p[R_B3:R_B3 + 1, :]
    r_mean = r_out[:, :C]
    r_logstd = r_out[:, C:2 * C]

    # diagonal_gaussian_sample (epsilon supplied from the host)
    u = jnp.exp(r_logstd) * eps + r_mean

    # ---- w, log_det_jac = bijection.forward(z, u) ----
    # TODO(synk): `bijection` is an injected dependency of CIF_step; a
    # conditional elementwise-affine bijection (w = z*exp(s(u)) + t(u)) is
    # used here as a concrete stand-in.  Both conditioner dots are fused.
    bij = jnp.dot(u, p[BIJ_W:BIJ_W + C, :],
                  preferred_element_type=jnp.float32) + p[BIJ_B:BIJ_B + 1, :]
    log_s = bij[:, :D]
    t = bij[:, D:2 * D]
    w = z * jnp.exp(log_s) + t

    # ---- q_u_given_w: fused MLP on cat([w, y], -1) ----
    h = (jnp.dot(w, p[Q_W1W:Q_W1W + D, :], preferred_element_type=jnp.float32)
         + jnp.dot(y, p[Q_W1Y:Q_W1Y + C, :], preferred_element_type=jnp.float32)
         + p[Q_B1:Q_B1 + 1, :])
    h = jnp.maximum(h, 0.0)
    h = jnp.dot(h, p[Q_W2:Q_W2 + HH, :],
                preferred_element_type=jnp.float32) + p[Q_B2:Q_B2 + 1, :]
    h = jnp.maximum(h, 0.0)
    q_out = jnp.dot(h, p[Q_W3:Q_W3 + HH, :],
                    preferred_element_type=jnp.float32) + p[Q_B3:Q_B3 + 1, :]
    q_mean = q_out[:, :C]
    q_logstd = q_out[:, C:2 * C]

    # ---- log_weight = log_det_jac + log_q_u - log_r_u, ONE lane reduction ----
    # LOG_CONST cancels between log_q_u and log_r_u.
    # r-quadratic: (u - r_mean) * exp(-r_logstd) == eps exactly by construction.
    q_resid = (u - q_mean) * jnp.exp(-q_logstd)
    contrib = (log_s + r_logstd - q_logstd
               + 0.5 * (eps * eps) - 0.5 * (q_resid * q_resid))   # (TB, 8)
    log_weight = jnp.sum(contrib, axis=-1, keepdims=True)          # (TB, 1)

    # ---- lane-dense output, two direct stores (no concat) ----
    out_ref[:, :D] = w
    out_ref[:, D:] = jnp.broadcast_to(log_weight, (w.shape[0], D))


# ---------------------------------------------------------------------------
# Wrapper: one pallas_call; 1-D parallel grid over batch tiles; the parameter
# slab stays VMEM-resident across the grid (constant index_map).
# ---------------------------------------------------------------------------
def cif_step_forward(z, y, eps, p_slab, *, tile_b=TILE_B):
    btot = z.shape[0]
    assert btot % tile_b == 0
    grid = (btot // tile_b,)

    flops = btot * 2 * (4 * HH * HH + 5 * D * HH)        # 7 matmuls (fused pairs)
    transcendentals = btot * 3 * C                       # 3 exp's of width C
    bytes_accessed = 4 * (btot * (D + 3 * C + 2 * D) + P_ROWS * HH)

    out = pl.pallas_call(
        cif_step_kernel,
        out_shape=jax.ShapeDtypeStruct((btot, 2 * D), jnp.float32),
        grid_spec=pltpu.PrefetchScalarGridSpec(
            num_scalar_prefetch=0,
            grid=grid,
            in_specs=[
                pl.BlockSpec((tile_b, D), lambda i: (i, 0)),        # z
                pl.BlockSpec((tile_b, C), lambda i: (i, 0)),        # y
                pl.BlockSpec((tile_b, C), lambda i: (i, 0)),        # eps
                pl.BlockSpec((P_ROWS, HH), lambda i: (0, 0)),       # slab (resident)
            ],
            out_specs=pl.BlockSpec((tile_b, 2 * D), lambda i: (i, 0)),
        ),
        compiler_params=pltpu.CompilerParams(
            dimension_semantics=("parallel",)),
        cost_estimate=pl.CostEstimate(flops=flops,
                                      transcendentals=transcendentals,
                                      bytes_accessed=bytes_accessed),
    )(z, y, eps, p_slab)
    return out[:, :D], out[:, D]


# ---------------------------------------------------------------------------
# Deterministic parameter construction (synthetic, PyTorch-Linear-style init)
# ---------------------------------------------------------------------------
def _init_linear(key, fan_in, fan_out):
    kw, kb = jax.random.split(key)
    lim = 1.0 / math.sqrt(fan_in)
    w = jax.random.uniform(kw, (fan_in, fan_out), jnp.float32, -lim, lim)
    b = jax.random.uniform(kb, (fan_out,), jnp.float32, -lim, lim)
    return w, b


def _init_mlp(key):
    k1, k2, k3 = jax.random.split(key, 3)
    w1, b1 = _init_linear(k1, COND, H)
    w2, b2 = _init_linear(k2, H, H)
    w3, b3 = _init_linear(k3, H, C)
    return (w1, b1, w2, b2, w3, b3)


def make_raw_params(key):
    keys = jax.random.split(key, 6)
    r_shift = _init_mlp(keys[0])
    r_logscale = _init_mlp(keys[1])
    q_shift = _init_mlp(keys[2])
    q_logscale = _init_mlp(keys[3])
    ws, bs = _init_linear(keys[4], C, D)      # log-scale conditioner (scaled down)
    wt, bt = _init_linear(keys[5], C, D)      # shift conditioner
    bij = (0.1 * ws, 0.1 * bs, wt, bt)
    return (r_shift, r_logscale, q_shift, q_logscale, bij)


def pack_params(raw):
    """Pack all parameters into one (P_ROWS, 64) f32 slab (host-side, once)."""
    r_s, r_l, q_s, q_l, (ws, bs, wt, bt) = raw
    P = np.zeros((P_ROWS, HH), np.float32)

    def a(x):
        return np.asarray(x, dtype=np.float32)

    def blockdiag(x, y):
        out = np.zeros((x.shape[0] + y.shape[0], x.shape[1] + y.shape[1]),
                       np.float32)
        out[:x.shape[0], :x.shape[1]] = x
        out[x.shape[0]:, x.shape[1]:] = y
        return out

    # --- r pair (fused shift | log-scale along lanes) ---
    w1 = np.concatenate([a(r_s[0]), a(r_l[0])], axis=1)        # (16, 64)
    P[R_W1Z:R_W1Z + D, :] = w1[:D]                             # z row-block
    P[R_W1Y:R_W1Y + C, :] = w1[D:]                             # y row-block
    P[R_B1, :] = np.concatenate([a(r_s[1]), a(r_l[1])])
    P[R_W2:R_W2 + HH, :] = blockdiag(a(r_s[2]), a(r_l[2]))
    P[R_B2, :] = np.concatenate([a(r_s[3]), a(r_l[3])])
    P[R_W3:R_W3 + HH, :2 * C] = blockdiag(a(r_s[4]), a(r_l[4]))
    P[R_B3, :2 * C] = np.concatenate([a(r_s[5]), a(r_l[5])])

    # --- q pair ---
    w1q = np.concatenate([a(q_s[0]), a(q_l[0])], axis=1)       # (16, 64)
    P[Q_W1W:Q_W1W + D, :] = w1q[:D]                            # w row-block
    P[Q_W1Y:Q_W1Y + C, :] = w1q[D:]                            # y row-block
    P[Q_B1, :] = np.concatenate([a(q_s[1]), a(q_l[1])])
    P[Q_W2:Q_W2 + HH, :] = blockdiag(a(q_s[2]), a(q_l[2]))
    P[Q_B2, :] = np.concatenate([a(q_s[3]), a(q_l[3])])
    P[Q_W3:Q_W3 + HH, :2 * C] = blockdiag(a(q_s[4]), a(q_l[4]))
    P[Q_B3, :2 * C] = np.concatenate([a(q_s[5]), a(q_l[5])])

    # --- bijection conditioners (fused) ---
    P[BIJ_W:BIJ_W + C, :2 * D] = np.concatenate([a(ws), a(wt)], axis=1)
    P[BIJ_B, :2 * D] = np.concatenate([a(bs), a(bt)])

    return jnp.asarray(P)


# ---------------------------------------------------------------------------
# Pure-JAX reference (mirrors the PyTorch semantics) for a sanity check
# ---------------------------------------------------------------------------
def reference_forward(z, y, eps, raw):
    r_s, r_l, q_s, q_l, (ws, bs, wt, bt) = raw

    def mlp(x, p):
        w1, b1, w2, b2, w3, b3 = p
        h = jnp.maximum(x @ w1 + b1, 0.0)
        h = jnp.maximum(h @ w2 + b2, 0.0)
        return h @ w3 + b3

    def lp(x, m, ls):
        var = jnp.exp(ls) ** 2
        return (-0.5 * C * math.log(2 * math.pi)
                - jnp.sum(ls, -1)
                - 0.5 * jnp.sum((x - m) ** 2 / var, -1))

    zy = jnp.concatenate([z, y], -1)
    r_m, r_ls = mlp(zy, r_s), mlp(zy, r_l)
    u = jnp.exp(r_ls) * eps + r_m
    log_r_u = lp(u, r_m, r_ls)
    log_s = u @ ws + bs
    t = u @ wt + bt
    w = z * jnp.exp(log_s) + t
    ldj = jnp.sum(log_s, -1)
    wy = jnp.concatenate([w, y], -1)
    q_m, q_ls = mlp(wy, q_s), mlp(wy, q_l)
    log_q_u = lp(u, q_m, q_ls)
    return w, ldj + log_q_u - log_r_u


# ---------------------------------------------------------------------------
if __name__ == "__main__":
    key = jax.random.PRNGKey(0)
    k_z, k_y, k_eps, k_params = jax.random.split(key, 4)

    z = jax.random.normal(k_z, (B_TOTAL, D), jnp.float32)
    y = jax.random.normal(k_y, (B_TOTAL, C), jnp.float32)
    # torch.randn_like equivalent: epsilon drawn on the host, fed to the kernel
    eps = jax.random.normal(k_eps, (B_TOTAL, C), jnp.float32)

    raw_params = make_raw_params(k_params)
    p_slab = pack_params(raw_params)

    w, log_weight = cif_step_forward(z, y, eps, p_slab)
    jax.block_until_ready((w, log_weight))

    w_ref, lw_ref = reference_forward(z, y, eps, raw_params)
    assert jnp.allclose(w, w_ref, atol=1e-4, rtol=1e-4)
    assert jnp.allclose(log_weight, lw_ref, atol=1e-4, rtol=1e-4)

    print("KERNEL_OK")
</pallas_src>

<mosaic_0001>
module attributes {stable_mosaic.version = 11 : i64} {
  func.func @cif_step_kernel(%arg0: i32, %arg1: memref<64x8xf32, #tpu.memory_space<vmem>>, %arg2: memref<64x8xf32, #tpu.memory_space<vmem>>, %arg3: memref<64x8xf32, #tpu.memory_space<vmem>>, %arg4: memref<352x64xf32, #tpu.memory_space<vmem>>, %arg5: memref<64x16xf32, #tpu.memory_space<vmem>>) attributes {dimension_semantics = [#tpu.dimension_semantics<parallel>], iteration_bounds = array<i64: 2>, scalar_prefetch = 0 : i64, scratch_operands = 0 : i64, tpu.core_type = #tpu.core_type<tc>, window_params = [{transform_indices = @transform_0, window_bounds = array<i64: 64, 8>}, {transform_indices = @transform_1, window_bounds = array<i64: 64, 8>}, {transform_indices = @transform_2, window_bounds = array<i64: 64, 8>}, {pipeline_mode = #tpu.pipeline_mode<synchronous>, transform_indices = @transform_3, window_bounds = array<i64: 352, 64>}, {transform_indices = @transform_4, window_bounds = array<i64: 64, 16>}]} {
    %c0 = arith.constant 0 : index
    %c0_0 = arith.constant 0 : index
    %0 = vector.load %arg1[%c0, %c0_0] : memref<64x8xf32, #tpu.memory_space<vmem>>, vector<64x8xf32>
    %c0_1 = arith.constant 0 : index
    %c0_2 = arith.constant 0 : index
    %1 = vector.load %arg2[%c0_1, %c0_2] : memref<64x8xf32, #tpu.memory_space<vmem>>, vector<64x8xf32>
    %c0_3 = arith.constant 0 : index
    %c0_4 = arith.constant 0 : index
    %2 = vector.load %arg3[%c0_3, %c0_4] : memref<64x8xf32, #tpu.memory_space<vmem>>, vector<64x8xf32>
    %c0_5 = arith.constant 0 : index
    %c0_6 = arith.constant 0 : index
    %3 = vector.load %arg4[%c0_5, %c0_6] : memref<352x64xf32, #tpu.memory_space<vmem>>, vector<8x64xf32>
    %cst = arith.constant dense<0.000000e+00> : vector<64x64xf32>
    %4 = tpu.matmul %0, %3, %cst {dimension_numbers = #tpu.dot_dimension_numbers<[1], [0], [0], [1], [0, 0, 1, 1], [], []>} : vector<64x8xf32>, vector<8x64xf32>, vector<64x64xf32> -> vector<64x64xf32>
    %c8 = arith.constant 8 : index
    %c0_7 = arith.constant 0 : index
    %5 = vector.load %arg4[%c8, %c0_7] : memref<352x64xf32, #tpu.memory_space<vmem>>, vector<8x64xf32>
    %cst_8 = arith.constant dense<0.000000e+00> : vector<64x64xf32>
    %6 = tpu.matmul %1, %5, %cst_8 {dimension_numbers = #tpu.dot_dimension_numbers<[1], [0], [0], [1], [0, 0, 1, 1], [], []>} : vector<64x8xf32>, vector<8x64xf32>, vector<64x64xf32> -> vector<64x64xf32>
    %7 = arith.addf %4, %6 : vector<64x64xf32>
    %c16 = arith.constant 16 : index
    %c0_9 = arith.constant 0 : index
    %8 = vector.load %arg4[%c16, %c0_9] : memref<352x64xf32, #tpu.memory_space<vmem>>, vector<1x64xf32>
    %9 = vector.broadcast %8 : vector<1x64xf32> to vector<64x64xf32>
    %10 = arith.addf %7, %9 : vector<64x64xf32>
    %cst_10 = arith.constant 0.000000e+00 : f32
    %11 = vector.broadcast %cst_10 : f32 to vector<64x64xf32>
    %12 = arith.maximumf %10, %11 : vector<64x64xf32>
    %c24 = arith.constant 24 : index
    %c0_11 = arith.constant 0 : index
    %13 = vector.load %arg4[%c24, %c0_11] : memref<352x64xf32, #tpu.memory_space<vmem>>, vector<64x64xf32>
    %cst_12 = arith.constant dense<0.000000e+00> : vector<64x64xf32>
    %14 = tpu.matmul %12, %13, %cst_12 {dimension_numbers = #tpu.dot_dimension_numbers<[1], [0], [0], [1], [0, 0, 1, 1], [], []>} : vector<64x64xf32>, vector<64x64xf32>, vector<64x64xf32> -> vector<64x64xf32>
    %c88 = arith.constant 88 : index
    %c0_13 = arith.constant 0 : index
    %15 = vector.load %arg4[%c88, %c0_13] : memref<352x64xf32, #tpu.memory_space<vmem>>, vector<1x64xf32>
    %16 = vector.broadcast %15 : vector<1x64xf32> to vector<64x64xf32>
    %17 = arith.addf %14, %16 : vector<64x64xf32>
    %cst_14 = arith.constant 0.000000e+00 : f32
    %18 = vector.broadcast %cst_14 : f32 to vector<64x64xf32>
    %19 = arith.maximumf %17, %18 : vector<64x64xf32>
    %c96 = arith.constant 96 : index
    %c0_15 = arith.constant 0 : index
    %20 = vector.load %arg4[%c96, %c0_15] : memref<352x64xf32, #tpu.memory_space<vmem>>, vector<64x64xf32>
    %cst_16 = arith.constant dense<0.000000e+00> : vector<64x64xf32>
    %21 = tpu.matmul %19, %20, %cst_16 {dimension_numbers = #tpu.dot_dimension_numbers<[1], [0], [0], [1], [0, 0, 1, 1], [], []>} : vector<64x64xf32>, vector<64x64xf32>, vector<64x64xf32> -> vector<64x64xf32>
    %c160 = arith.constant 160 : index
    %c0_17 = arith.constant 0 : index
    %22 = vector.load %arg4[%c160, %c0_17] : memref<352x64xf32, #tpu.memory_space<vmem>>, vector<1x64xf32>
    %23 = vector.broadcast %22 : vector<1x64xf32> to vector<64x64xf32>
    %24 = arith.addf %21, %23 : vector<64x64xf32>
    %25 = vector.extract_strided_slice %24 {offsets = [0, 0], sizes = [64, 8], strides = [1, 1]} : vector<64x64xf32> to vector<64x8xf32>
    %26 = vector.extract_strided_slice %24 {offsets = [0, 8], sizes = [64, 8], strides = [1, 1]} : vector<64x64xf32> to vector<64x8xf32>
    %27 = math.exp %26 : vector<64x8xf32>
    %28 = arith.mulf %27, %2 : vector<64x8xf32>
    %29 = arith.addf %28, %25 : vector<64x8xf32>
    %c336 = arith.constant 336 : index
    %c0_18 = arith.constant 0 : index
    %30 = vector.load %arg4[%c336, %c0_18] : memref<352x64xf32, #tpu.memory_space<vmem>>, vector<8x64xf32>
    %cst_19 = arith.constant dense<0.000000e+00> : vector<64x64xf32>
    %31 = tpu.matmul %29, %30, %cst_19 {dimension_numbers = #tpu.dot_dimension_numbers<[1], [0], [0], [1], [0, 0, 1, 1], [], []>} : vector<64x8xf32>, vector<8x64xf32>, vector<64x64xf32> -> vector<64x64xf32>
    %c344 = arith.constant 344 : index
    %c0_20 = arith.constant 0 : index
    %32 = vector.load %arg4[%c344, %c0_20] : memref<352x64xf32, #tpu.memory_space<vmem>>, vector<1x64xf32>
    %33 = vector.broadcast %32 : vector<1x64xf32> to vector<64x64xf32>
    %34 = arith.addf %31, %33 : vector<64x64xf32>
    %35 = vector.extract_strided_slice %34 {offsets = [0, 0], sizes = [64, 8], strides = [1, 1]} : vector<64x64xf32> to vector<64x8xf32>
    %36 = vector.extract_strided_slice %34 {offsets = [0, 8], sizes = [64, 8], strides = [1, 1]} : vector<64x64xf32> to vector<64x8xf32>
    %37 = math.exp %35 : vector<64x8xf32>
    %38 = arith.mulf %0, %37 : vector<64x8xf32>
    %39 = arith.addf %38, %36 : vector<64x8xf32>
    %c168 = arith.constant 168 : index
    %c0_21 = arith.constant 0 : index
    %40 = vector.load %arg4[%c168, %c0_21] : memref<352x64xf32, #tpu.memory_space<vmem>>, vector<8x64xf32>
    %cst_22 = arith.constant dense<0.000000e+00> : vector<64x64xf32>
    %41 = tpu.matmul %39, %40, %cst_22 {dimension_numbers = #tpu.dot_dimension_numbers<[1], [0], [0], [1], [0, 0, 1, 1], [], []>} : vector<64x8xf32>, vector<8x64xf32>, vector<64x64xf32> -> vector<64x64xf32>
    %c176 = arith.constant 176 : index
    %c0_23 = arith.constant 0 : index
    %42 = vector.load %arg4[%c176, %c0_23] : memref<352x64xf32, #tpu.memory_space<vmem>>, vector<8x64xf32>
    %cst_24 = arith.constant dense<0.000000e+00> : vector<64x64xf32>
    %43 = tpu.matmul %1, %42, %cst_24 {dimension_numbers = #tpu.dot_dimension_numbers<[1], [0], [0], [1], [0, 0, 1, 1], [], []>} : vector<64x8xf32>, vector<8x64xf32>, vector<64x64xf32> -> vector<64x64xf32>
    %44 = arith.addf %41, %43 : vector<64x64xf32>
    %c184 = arith.constant 184 : index
    %c0_25 = arith.constant 0 : index
    %45 = vector.load %arg4[%c184, %c0_25] : memref<352x64xf32, #tpu.memory_space<vmem>>, vector<1x64xf32>
    %46 = vector.broadcast %45 : vector<1x64xf32> to vector<64x64xf32>
    %47 = arith.addf %44, %46 : vector<64x64xf32>
    %cst_26 = arith.constant 0.000000e+00 : f32
    %48 = vector.broadcast %cst_26 : f32 to vector<64x64xf32>
    %49 = arith.maximumf %47, %48 : vector<64x64xf32>
    %c192 = arith.constant 192 : index
    %c0_27 = arith.constant 0 : index
    %50 = vector.load %arg4[%c192, %c0_27] : memref<352x64xf32, #tpu.memory_space<vmem>>, vector<64x64xf32>
    %cst_28 = arith.constant dense<0.000000e+00> : vector<64x64xf32>
    %51 = tpu.matmul %49, %50, %cst_28 {dimension_numbers = #tpu.dot_dimension_numbers<[1], [0], [0], [1], [0, 0, 1, 1], [], []>} : vector<64x64xf32>, vector<64x64xf32>, vector<64x64xf32> -> vector<64x64xf32>
    %c256 = arith.constant 256 : index
    %c0_29 = arith.constant 0 : index
    %52 = vector.load %arg4[%c256, %c0_29] : memref<352x64xf32, #tpu.memory_space<vmem>>, vector<1x64xf32>
    %53 = vector.broadcast %52 : vector<1x64xf32> to vector<64x64xf32>
    %54 = arith.addf %51, %53 : vector<64x64xf32>
    %cst_30 = arith.constant 0.000000e+00 : f32
    %55 = vector.broadcast %cst_30 : f32 to vector<64x64xf32>
    %56 = arith.maximumf %54, %55 : vector<64x64xf32>
    %c264 = arith.constant 264 : index
    %c0_31 = arith.constant 0 : index
    %57 = vector.load %arg4[%c264, %c0_31] : memref<352x64xf32, #tpu.memory_space<vmem>>, vector<64x64xf32>
    %cst_32 = arith.constant dense<0.000000e+00> : vector<64x64xf32>
    %58 = tpu.matmul %56, %57, %cst_32 {dimension_numbers = #tpu.dot_dimension_numbers<[1], [0], [0], [1], [0, 0, 1, 1], [], []>} : vector<64x64xf32>, vector<64x64xf32>, vector<64x64xf32> -> vector<64x64xf32>
    %c328 = arith.constant 328 : index
    %c0_33 = arith.constant 0 : index
    %59 = vector.load %arg4[%c328, %c0_33] : memref<352x64xf32, #tpu.memory_space<vmem>>, vector<1x64xf32>
    %60 = vector.broadcast %59 : vector<1x64xf32> to vector<64x64xf32>
    %61 = arith.addf %58, %60 : vector<64x64xf32>
    %62 = vector.extract_strided_slice %61 {offsets = [0, 0], sizes = [64, 8], strides = [1, 1]} : vector<64x64xf32> to vector<64x8xf32>
    %63 = vector.extract_strided_slice %61 {offsets = [0, 8], sizes = [64, 8], strides = [1, 1]} : vector<64x64xf32> to vector<64x8xf32>
    %64 = arith.subf %29, %62 : vector<64x8xf32>
    %cst_34 = arith.constant 0.000000e+00 : f32
    %65 = vector.broadcast %cst_34 : f32 to vector<64x8xf32>
    %66 = arith.subf %65, %63 : vector<64x8xf32>
    %67 = math.exp %66 : vector<64x8xf32>
    %68 = arith.mulf %64, %67 : vector<64x8xf32>
    %69 = arith.addf %35, %26 : vector<64x8xf32>
    %70 = arith.subf %69, %63 : vector<64x8xf32>
    %71 = arith.mulf %2, %2 : vector<64x8xf32>
    %cst_35 = arith.constant 5.000000e-01 : f32
    %72 = vector.broadcast %cst_35 : f32 to vector<64x8xf32>
    %73 = arith.mulf %72, %71 : vector<64x8xf32>
    %74 = arith.addf %70, %73 : vector<64x8xf32>
    %75 = arith.mulf %68, %68 : vector<64x8xf32>
    %cst_36 = arith.constant 5.000000e-01 : f32
    %76 = vector.broadcast %cst_36 : f32 to vector<64x8xf32>
    %77 = arith.mulf %76, %75 : vector<64x8xf32>
    %78 = arith.subf %74, %77 : vector<64x8xf32>
    %cst_37 = arith.constant dense<0.000000e+00> : vector<64xf32>
    %79 = vector.multi_reduction <add>, %78, %cst_37 [1] : vector<64x8xf32> to vector<64xf32>
    %80 = vector.shape_cast %79 : vector<64xf32> to vector<64x1xf32>
    %c0_38 = arith.constant 0 : index
    %c0_39 = arith.constant 0 : index
    %81 = vector.load %arg5[%c0_38, %c0_39] : memref<64x16xf32, #tpu.memory_space<vmem>>, vector<64x8xf32>
    tpu.vector_store %arg5[%c0_38, %c0_39], %39 {strides = array<i32>} : memref<64x16xf32, #tpu.memory_space<vmem>>, vector<64x8xf32>,
    %82 = vector.shape_cast %80 : vector<64x1xf32> to vector<64x1xf32>
    %83 = vector.broadcast %82 : vector<64x1xf32> to vector<64x8xf32>
    %c0_40 = arith.constant 0 : index
    %c8_41 = arith.constant 8 : index
    %84 = vector.load %arg5[%c0_40, %c8_41] : memref<64x16xf32, #tpu.memory_space<vmem>>, vector<64x8xf32>
    tpu.vector_store %arg5[%c0_40, %c8_41], %83 {strides = array<i32>} : memref<64x16xf32, #tpu.memory_space<vmem>>, vector<64x8xf32>,
    return
  }
  func.func @transform_0(%arg0: i32) -> (i32, i32) {
    %c0_i32 = arith.constant 0 : i32
    %c0_i32_0 = arith.constant 0 : i32
    return %arg0, %c0_i32 : i32, i32
  }
  func.func @transform_1(%arg0: i32) -> (i32, i32) {
    %c0_i32 = arith.constant 0 : i32
    %c0_i32_0 = arith.constant 0 : i32
    return %arg0, %c0_i32 : i32, i32
  }
  func.func @transform_2(%arg0: i32) -> (i32, i32) {
    %c0_i32 = arith.constant 0 : i32
    %c0_i32_0 = arith.constant 0 : i32
    return %arg0, %c0_i32 : i32, i32
  }
  func.func @transform_3(%arg0: i32) -> (i32, i32) {
    %c0_i32 = arith.constant 0 : i32
    %c0_i32_0 = arith.constant 0 : i32
    %c0_i32_1 = arith.constant 0 : i32
    return %c0_i32, %c0_i32_0 : i32, i32
  }
  func.func @transform_4(%arg0: i32) -> (i32, i32) {
    %c0_i32 = arith.constant 0 : i32
    %c0_i32_0 = arith.constant 0 : i32
    return %arg0, %c0_i32 : i32, i32
  }
}

</mosaic_0001>

<llo_original>
// kernel: tpu_custom_call.1
$region0: #{tpu_custom_call.1}
  #allocation0 [shape = 'u32[]', space=smem, size = 0x4, offset = 0x4, fixed_abs, tag = 'smem constant byte address 0x4 - core index']
  #allocation1 [shape = 'u32[144,128]{1,0:T(1,128)}', space=vmem, size = 0x12000, scoped, tag = 'internal scratch']
  %s0 = inlined_call_operand.vmem [shape: f32[128,8], index: 0, kind: input, shape index: {}]
  %s1 = inlined_call_operand.vmem [shape: f32[128,8], index: 1, kind: input, shape index: {}]
  %s2 = inlined_call_operand.vmem [shape: f32[128,8], index: 2, kind: input, shape index: {}]
  %s3 = inlined_call_operand.vmem [shape: f32[352,64], index: 3, kind: input, shape index: {}]
  %s4 = inlined_call_operand.vmem [shape: f32[128,16], index: 4, kind: output, shape index: {}]
  %s5 = sld [smem:[#allocation0]]
  $region49: #{tpu_custom_call.1} parent=0
    _
  %s7 = ssub.s32 1, %s5
  %s8 = scalar_select 0, %s7, %s5
  loop: start=0, step=1, limit=4
  $region2: #{tpu_custom_call.1} parent=0 // loop_pre_header
    _
  $region3: #{tpu_custom_call.1} parent=0 // loop_header
    %s10 = sphi 0, %s14
    %p11 = scmp.ge.s32.totalorder %s10, 4
    %s20 = sphi 0, %s22
    %s23 = sphi 0, %s20
    %s24 = sphi 0, %s23
    %s40 = sphi 0, %s24
    %s46 = sphi 0, %s48
    %s49 = sphi 0, %s46
    %s50 = sphi 0, %s49
    %s66 = sphi 0, %s50
    %s72 = sphi 0, %s74
    %s75 = sphi 0, %s72
    %s76 = sphi 0, %s75
    %s92 = sphi 0, %s76
    %s96 = sphi 0, %s96
    %s98 = sphi 0, %s96
    %s99 = sphi 0, %s98
    %s113 = sphi 0, %s99
    %s119 = sphi 0, %s121
    %s122 = sphi 0, %s119
    %s123 = sphi 0, %s122
    %s139 = sphi 0, %s123
  $region4: #{tpu_custom_call.1} parent=0 // loop_header_branch
    %13 = sbr.rel (%p11) target = $region8
  $region5: #{tpu_custom_call.1} parent=0 // loop_body
    %s15 = ssub.s32 %s10, 1
    %s16 = ssub.s32 %s10, 2
    %s17 = sadd.s32 %s10, 1
    %s18 = ssub.s32 %s10, %s17
    %p19 = scmp.eq.s32.totalorder %s18, 0
    %s21 = sadd.s32 %s20, 1
    %s22 = scalar_select %p19, %s20, %s21
    %p25 = pneg %p19
    %p26 = scmp.eq.s32.totalorder %s10, 1
    %p27 = por %p25, %p26
    %p28 = scmp.ne.s32.totalorder %s20, %s23
    %p29 = scmp.eq.s32.totalorder %s10, 0
    %p30 = por %p28, %p29
    %p31 = scmp.ne.s32.totalorder %s20, %s23
    %p32 = scmp.eq.s32.totalorder %s15, 1
    %p33 = por %p31, %p32
    %p34 = scmp.ne.s32.totalorder %s23, %s24
    %p35 = scmp.eq.s32.totalorder %s15, 0
    %p36 = por %p34, %p35
    %p37 = scmp.ne.s32.totalorder %s23, %s24
    %p38 = scmp.eq.s32.totalorder %s16, 1
    %p39 = por %p37, %p38
    %p41 = scmp.ne.s32.totalorder %s24, %s40
    %p42 = scmp.eq.s32.totalorder %s16, 0
    %p43 = por %p41, %p42
    %s44 = ssub.s32 %s10, %s17
    %p45 = scmp.eq.s32.totalorder %s44, 0
    %s47 = sadd.s32 %s46, 1
    %s48 = scalar_select %p45, %s46, %s47
    %p51 = pneg %p45
    %p52 = scmp.eq.s32.totalorder %s10, 1
    %p53 = por %p51, %p52
    %p54 = scmp.ne.s32.totalorder %s46, %s49
    %p55 = scmp.eq.s32.totalorder %s10, 0
    %p56 = por %p54, %p55
    %p57 = scmp.ne.s32.totalorder %s46, %s49
    %p58 = scmp.eq.s32.totalorder %s15, 1
    %p59 = por %p57, %p58
    %p60 = scmp.ne.s32.totalorder %s49, %s50
    %p61 = scmp.eq.s32.totalorder %s15, 0
    %p62 = por %p60, %p61
    %p63 = scmp.ne.s32.totalorder %s49, %s50
    %p64 = scmp.eq.s32.totalorder %s16, 1
    %p65 = por %p63, %p64
    %p67 = scmp.ne.s32.totalorder %s50, %s66
    %p68 = scmp.eq.s32.totalorder %s16, 0
    %p69 = por %p67, %p68
    %s70 = ssub.s32 %s10, %s17
    %p71 = scmp.eq.s32.totalorder %s70, 0
    %s73 = sadd.s32 %s72, 1
    %s74 = scalar_select %p71, %s72, %s73
    %p77 = pneg %p71
    %p78 = scmp.eq.s32.totalorder %s10, 1
    %p79 = por %p77, %p78
    %p80 = scmp.ne.s32.totalorder %s72, %s75
    %p81 = scmp.eq.s32.totalorder %s10, 0
    %p82 = por %p80, %p81
    %p83 = scmp.ne.s32.totalorder %s72, %s75
    %p84 = scmp.eq.s32.totalorder %s15, 1
    %p85 = por %p83, %p84
    %p86 = scmp.ne.s32.totalorder %s75, %s76
    %p87 = scmp.eq.s32.totalorder %s15, 0
    %p88 = por %p86, %p87
    %p89 = scmp.ne.s32.totalorder %s75, %s76
    %p90 = scmp.eq.s32.totalorder %s16, 1
    %p91 = por %p89, %p90
    %p93 = scmp.ne.s32.totalorder %s76, %s92
    %p94 = scmp.eq.s32.totalorder %s16, 0
    %p95 = por %p93, %p94
    %s97 = sadd.s32 %s96, 1
    %p100 = scmp.eq.s32.totalorder %s10, 1
    %p101 = scmp.ne.s32.totalorder %s96, %s98
    %p102 = scmp.eq.s32.totalorder %s10, 0
    %p103 = por %p101, %p102
    %p104 = scmp.ne.s32.totalorder %s96, %s98
    %p105 = scmp.eq.s32.totalorder %s15, 1
    %p106 = por %p104, %p105
    %p107 = scmp.ne.s32.totalorder %s98, %s99
    %p108 = scmp.eq.s32.totalorder %s15, 0
    %p109 = por %p107, %p108
    %p110 = scmp.ne.s32.totalorder %s98, %s99
    %p111 = scmp.eq.s32.totalorder %s16, 1
    %p112 = por %p110, %p111
    %p114 = scmp.ne.s32.totalorder %s99, %s113
    %p115 = scmp.eq.s32.totalorder %s16, 0
    %p116 = por %p114, %p115
    %s117 = ssub.s32 %s10, %s17
    %p118 = scmp.eq.s32.totalorder %s117, 0
    %s120 = sadd.s32 %s119, 1
    %s121 = scalar_select %p118, %s119, %s120
    %p124 = pneg %p118
    %p125 = scmp.eq.s32.totalorder %s10, 1
    %p126 = por %p124, %p125
    %p127 = scmp.ne.s32.totalorder %s119, %s122
    %p128 = scmp.eq.s32.totalorder %s10, 0
    %p129 = por %p127, %p128
    %p130 = scmp.ne.s32.totalorder %s119, %s122
    %p131 = scmp.eq.s32.totalorder %s15, 1
    %p132 = por %p130, %p131
    %p133 = scmp.ne.s32.totalorder %s122, %s123
    %p134 = scmp.eq.s32.totalorder %s15, 0
    %p135 = por %p133, %p134
    %p136 = scmp.ne.s32.totalorder %s122, %s123
    %p137 = scmp.eq.s32.totalorder %s16, 1
    %p138 = por %p136, %p137
    %p140 = scmp.ne.s32.totalorder %s123, %s139
    %p141 = scmp.eq.s32.totalorder %s16, 0
    %p142 = por %p140, %p141
    %p143 = scmp.le.s32.totalorder 1, %s10
    %p144 = scmp.lt.s32.totalorder %s10, 3
    %p145 = pnand %p143, %p144
    %p146 = pneg %p145
    // Predicated region
    $region9: #{tpu_custom_call.1} parent=5 // pred_check
      _
    $region10: #{tpu_custom_call.1} parent=5 // pred_check_branch
      %148 = sbr.rel (%p145) target = $region12
    $region11: #{tpu_custom_call.1} parent=5 // pred_region
      %s149 = ssub.s32 %s10, 1
      // Predicated region
      $region13: #{tpu_custom_call.1} parent=11 // pred_check
        %p150 = pneg %p109
      $region14: #{tpu_custom_call.1} parent=11 // pred_check_branch
        %152 = sbr.rel (%p150) target = $region16
      $region15: #{tpu_custom_call.1} parent=11 // pred_region
        _
      $region16: #{tpu_custom_call.1} parent=11 // pred_fallthru
        _
    $region12: #{tpu_custom_call.1} parent=5 // pred_fallthru
      _
    %p153 = scmp.lt.s32.totalorder %s10, 2
    // Predicated region
    $region17: #{tpu_custom_call.1} parent=5 // pred_check
      %p154 = pneg %p153
    $region18: #{tpu_custom_call.1} parent=5 // pred_check_branch
      %156 = sbr.rel (%p154) target = $region20
    $region19: #{tpu_custom_call.1} parent=5 // pred_region
      // Predicated region
      $region21: #{tpu_custom_call.1} parent=19 // pred_check
        %p157 = pneg %p30
      $region22: #{tpu_custom_call.1} parent=19 // pred_check_branch
        %159 = sbr.rel (%p157) target = $region24
      $region23: #{tpu_custom_call.1} parent=19 // pred_region
        %s160 = smul.u32 8, %s10
        %p161 = scmp.lt.s32.totalorder %s160, 15
        %s162 = scalar_select %p161, %s160, 15
        %s163 = smul.addr %s162, 8
        %s164 = scalar_lea.vmem %s0, %s163
        %s165 = smul.u32 8, %s10
      $region24: #{tpu_custom_call.1} parent=19 // pred_fallthru
        _
      // Predicated region
      $region25: #{tpu_custom_call.1} parent=19 // pred_check
        %p166 = pneg %p56
      $region26: #{tpu_custom_call.1} parent=19 // pred_check_branch
        %168 = sbr.rel (%p166) target = $region28
      $region27: #{tpu_custom_call.1} parent=19 // pred_region
        %s169 = smul.u32 8, %s10
        %p170 = scmp.lt.s32.totalorder %s169, 15
        %s171 = scalar_select %p170, %s169, 15
        %s172 = smul.addr %s171, 8
        %s173 = scalar_lea.vmem %s1, %s172
        %s174 = smul.u32 8, %s10
      $region28: #{tpu_custom_call.1} parent=19 // pred_fallthru
        _
      // Predicated region
      $region29: #{tpu_custom_call.1} parent=19 // pred_check
        %p175 = pneg %p82
      $region30: #{tpu_custom_call.1} parent=19 // pred_check_branch
        %177 = sbr.rel (%p175) target = $region32
      $region31: #{tpu_custom_call.1} parent=19 // pred_region
        %s178 = smul.u32 8, %s10
        %p179 = scmp.lt.s32.totalorder %s178, 15
        %s180 = scalar_select %p179, %s178, 15
        %s181 = smul.addr %s180, 8
        %s182 = scalar_lea.vmem %s2, %s181
        %s183 = smul.u32 8, %s10
      $region32: #{tpu_custom_call.1} parent=19 // pred_fallthru
        _
    $region20: #{tpu_custom_call.1} parent=5 // pred_fallthru
      _
    %p184 = scmp.le.s32.totalorder 1, %s10
    %p185 = scmp.lt.s32.totalorder %s10, 3
    %p186 = pnand %p184, %p185
    %p187 = pneg %p186
    // Predicated region
    $region33: #{tpu_custom_call.1} parent=5 // pred_check
      _
    $region34: #{tpu_custom_call.1} parent=5 // pred_check_branch
      %189 = sbr.rel (%p186) target = $region36
    $region35: #{tpu_custom_call.1} parent=5 // pred_region
      %s190 = ssub.s32 %s10, 1
      %s191 = smul.u32 8, %s15
      %p192 = scmp.lt.s32.totalorder %s191, 15
      %s193 = scalar_select %p192, %s191, 15
      %s194 = smul.addr %s193, 8
      %s195 = scalar_lea.vmem %s0, %s194
      %p196 = pneg %p36
      %p197 = pneg %p33
      %s198 = smul.u32 8, %s15
      %p199 = scmp.lt.s32.totalorder %s198, 15
      %s200 = scalar_select %p199, %s198, 15
      %s201 = smul.addr %s200, 8
      %s202 = scalar_lea.vmem %s1, %s201
      %p203 = pneg %p62
      %p204 = pneg %p59
      %s205 = smul.u32 8, %s15
      %p206 = scmp.lt.s32.totalorder %s205, 15
      %s207 = scalar_select %p206, %s205, 15
      %s208 = smul.addr %s207, 8
      %s209 = scalar_lea.vmem %s2, %s208
      %p210 = pneg %p88
      %p211 = pneg %p85
      %p212 = pneg %p109
      %p213 = pneg %p106
      %p214 = pneg %p135
      %p215 = pneg %p132
      %s216 = smul.u32 8, %s15
      %p217 = scmp.lt.s32.totalorder %s216, 15
      %s218 = scalar_select %p217, %s216, 15
      %s219 = smul.addr %s218, 8
      %s220 = scalar_lea.vmem %s4, %s219
      %s221 = smul.u32 8, %s15
      %p222 = scmp.lt.s32.totalorder %s221, 15
      %s223 = scalar_select %p222, %s221, 15
      %s224 = smul.addr %s223, 8
      %s225 = scalar_lea.vmem %s0, %s224
      %s226 = smul.u32 8, %s15
      %s227 = smul.u32 8, %s15
      %p228 = scmp.lt.s32.totalorder %s227, 15
      %s229 = scalar_select %p228, %s227, 15
      %s230 = smul.addr %s229, 8
      %s231 = scalar_lea.vmem %s1, %s230
      %s232 = smul.u32 8, %s15
      %s233 = smul.u32 8, %s15
      %p234 = scmp.lt.s32.totalorder %s233, 15
      %s235 = scalar_select %p234, %s233, 15
      %s236 = smul.addr %s235, 8
      %s237 = scalar_lea.vmem %s2, %s236
      %s238 = smul.u32 8, %s15
      %s239 = smul.u32 8, %s15
      %p240 = scmp.lt.s32.totalorder %s239, 15
      %s241 = scalar_select %p240, %s239, 15
      %s242 = smul.addr %s241, 8
      %s243 = scalar_lea.vmem %s4, %s242
      %s244 = smul.u32 8, %s15
      %v245 = vld [vmem:[%s225] sm:$0xff]
      %v246 = vld [vmem:[%s225 + $0x8] sm:$0xff]
      %v247 = vld [vmem:[%s225 + $0x10] sm:$0xff]
      %v248 = vld [vmem:[%s225 + $0x18] sm:$0xff]
      %v249 = vld [vmem:[%s225 + $0x20] sm:$0xff]
      %v250 = vld [vmem:[%s225 + $0x28] sm:$0xff]
      %v251 = vld [vmem:[%s225 + $0x30] sm:$0xff]
      %v252 = vld [vmem:[%s225 + $0x38] sm:$0xff]
      %v253 = vld [vmem:[%s231] sm:$0xff]
      %v254 = vld [vmem:[%s231 + $0x8] sm:$0xff]
      %v255 = vld [vmem:[%s231 + $0x10] sm:$0xff]
      %v256 = vld [vmem:[%s231 + $0x18] sm:$0xff]
      %v257 = vld [vmem:[%s231 + $0x20] sm:$0xff]
      %v258 = vld [vmem:[%s231 + $0x28] sm:$0xff]
      %v259 = vld [vmem:[%s231 + $0x30] sm:$0xff]
      %v260 = vld [vmem:[%s231 + $0x38] sm:$0xff]
      %v261 = vld [vmem:[%s237] sm:$0xff]
      %v262 = vld [vmem:[%s237 + $0x8] sm:$0xff]
      %v263 = vld [vmem:[%s237 + $0x10] sm:$0xff]
      %v264 = vld [vmem:[%s237 + $0x18] sm:$0xff]
      %v265 = vld [vmem:[%s237 + $0x20] sm:$0xff]
      %v266 = vld [vmem:[%s237 + $0x28] sm:$0xff]
      %v267 = vld [vmem:[%s237 + $0x30] sm:$0xff]
      %v268 = vld [vmem:[%s237 + $0x38] sm:$0xff]
      %v269 = vld [vmem:[%s3] sm:$0xff]
      %v270 = vld [vmem:[%s3 + $0x8] sm:$0xff]
      %vm271 = vcmask 64512
      %v273 = vsel %vm271, %v253, 0
      %v276 = vsel %vm271, %v254, 0
      %v279 = vsel %vm271, %v255, 0
      %v282 = vsel %vm271, %v256, 0
      %v285 = vsel %vm271, %v257, 0
      %v288 = vsel %vm271, %v258, 0
      %v291 = vsel %vm271, %v259, 0
      %v294 = vsel %vm271, %v260, 0
      %296 = vmatprep.subr.mxu0 0.0
      %297 = vmatpush1.msra.mxu0 %v270
      %298 = vmatprep.subr.mxu0 0.0
      %299 = vmatpush1.msra.mxu0 0.0
      %300 = vmatprep.subr.mxu0 0.0
      %301 = vmatpush1.msra.mxu0 0.0
      %302 = vmatprep.subr.mxu0 0.0
      %303 = vmatpush1.msra.mxu0 0.0
      %304 = vmatprep.subr.mxu0 0.0
      %305 = vmatpush1.msra.mxu0 0.0
      %306 = vmatprep.subr.mxu0 0.0
      %307 = vmatpush1.msra.mxu0 0.0
      %308 = vmatprep.subr.mxu0 0.0
      %309 = vmatpush1.msra.mxu0 0.0
      %310 = vmatprep.subr.mxu0 0.0
      %311 = vmatpush1.msra.mxu0 0.0
      %312 = vmatprep.subr.mxu0 0.0
      %313 = vmatpush1.msra.mxu0 0.0
      %314 = vmatprep.subr.mxu0 0.0
      %315 = vmatpush1.msra.mxu0 0.0
      %316 = vmatprep.subr.mxu0 0.0
      %317 = vmatpush1.msra.mxu0 0.0
      %318 = vmatprep.subr.mxu0 0.0
      %319 = vmatpush1.msra.mxu0 0.0
      %320 = vmatprep.subr.mxu0 0.0
      %321 = vmatpush1.msra.mxu0 0.0
      %322 = vmatprep.subr.mxu0 0.0
      %323 = vmatpush1.msra.mxu0 0.0
      %324 = vmatprep.subr.mxu0 0.0
      %325 = vmatpush1.msra.mxu0 0.0
      %326 = vmatprep.subr.mxu0 0.0
      %327 = vmatpush1.msra.mxu0 0.0
      %328 = vmatprep.subr.mxu0 0.0
      %329 = vmatpush1.msra.mxu0 0.0
      %330 = vmatprep.subr.mxu0 0.0
      %331 = vmatpush1.msra.mxu0 0.0
      %332 = vmatprep.subr.mxu0 0.0
      %333 = vmatpush1.msra.mxu0 0.0
      %334 = vmatprep.subr.mxu0 0.0
      %335 = vmatpush1.msra.mxu0 0.0
      %336 = vmatprep.subr.mxu0 0.0
      %337 = vmatpush1.msra.mxu0 0.0
      %338 = vmatprep.subr.mxu0 0.0
      %339 = vmatpush1.msra.mxu0 0.0
      %340 = vmatprep.subr.mxu0 0.0
      %341 = vmatpush1.msra.mxu0 0.0
      %342 = vmatprep.subr.mxu0 0.0
      %343 = vmatpush1.msra.mxu0 0.0
      %344 = vmatprep.subr.mxu0 0.0
      %345 = vmatpush1.msra.mxu0 0.0
      %346 = vmatprep.subr.mxu0 0.0
      %347 = vmatpush1.msra.mxu0 0.0
      %348 = vmatprep.subr.mxu0 0.0
      %349 = vmatpush1.msra.mxu0 0.0
      %350 = vmatprep.subr.mxu0 0.0
      %351 = vmatpush1.msra.mxu0 0.0
      %352 = vmatprep.subr.mxu0 0.0
      %353 = vmatpush1.msra.mxu0 0.0
      %354 = vmatprep.subr.mxu0 0.0
      %355 = vmatpush1.msra.mxu0 0.0
      %356 = vmatprep.subr.mxu0 0.0
      %357 = vmatpush1.msra.mxu0 0.0
      %358 = vmatprep.subr.mxu0 0.0
      %359 = vmatpush1.msra.mxu0 0.0
      %360 = vmatprep.mubr.f32.mxu0 0.0
      %361 = vmatmul.mubr.f32.gmra.mrb[0].mxu0 %v273
      %v362 = vpop.f32.mrb[0].mxu0
      %v363 = vadd.f32 0.0, %v362
      %v364 = vpop.f32.mrb[0].mxu0
      %365 = vmatprep.mubr.f32.mxu0 0.0
      %366 = vmatmul.mubr.f32.gmra.mrb[0].mxu0 %v276
      %v367 = vpop.f32.mrb[0].mxu0
      %v368 = vadd.f32 0.0, %v367
      %v369 = vpop.f32.mrb[0].mxu0
      %370 = vmatprep.mubr.f32.mxu0 0.0
      %371 = vmatmul.mubr.f32.gmra.mrb[0].mxu0 %v279
      %v372 = vpop.f32.mrb[0].mxu0
      %v373 = vadd.f32 0.0, %v372
      %v374 = vpop.f32.mrb[0].mxu0
      %375 = vmatprep.mubr.f32.mxu0 0.0
      %376 = vmatmul.mubr.f32.gmra.mrb[0].mxu0 %v282
      %v377 = vpop.f32.mrb[0].mxu0
      %v378 = vadd.f32 0.0, %v377
      %v379 = vpop.f32.mrb[0].mxu0
      %380 = vmatprep.mubr.f32.mxu0 0.0
      %381 = vmatmul.mubr.f32.gmra.mrb[0].mxu0 %v285
      %v382 = vpop.f32.mrb[0].mxu0
      %v383 = vadd.f32 0.0, %v382
      %v384 = vpop.f32.mrb[0].mxu0
      %385 = vmatprep.mubr.f32.mxu0 0.0
      %386 = vmatmul.mubr.f32.gmra.mrb[0].mxu0 %v288
      %v387 = vpop.f32.mrb[0].mxu0
      %v388 = vadd.f32 0.0, %v387
      %v389 = vpop.f32.mrb[0].mxu0
      %390 = vmatprep.mubr.f32.mxu0 0.0
      %391 = vmatmul.mubr.f32.gmra.mrb[0].mxu0 %v291
      %v392 = vpop.f32.mrb[0].mxu0
      %v393 = vadd.f32 0.0, %v392
      %v394 = vpop.f32.mrb[0].mxu0
      %395 = vmatprep.mubr.f32.mxu0 0.0
      %396 = vmatmul.mubr.f32.gmra.mrb[0].mxu0 %v294
      %v397 = vpop.f32.mrb[0].mxu0
      %v398 = vadd.f32 0.0, %v397
      %v399 = vpop.f32.mrb[0].mxu0
      %400 = vdwg.mxu0
      %v402 = vsel %vm271, %v245, 0
      %v405 = vsel %vm271, %v246, 0
      %v408 = vsel %vm271, %v247, 0
      %v411 = vsel %vm271, %v248, 0
      %v414 = vsel %vm271, %v249, 0
      %v417 = vsel %vm271, %v250, 0
      %v420 = vsel %vm271, %v251, 0
      %v423 = vsel %vm271, %v252, 0
      %425 = vmatprep.subr.mxu0 0.0
      %426 = vmatpush1.msra.mxu0 %v269
      %427 = vmatprep.subr.mxu0 0.0
      %428 = vmatpush1.msra.mxu0 0.0
      %429 = vmatprep.subr.mxu0 0.0
      %430 = vmatpush1.msra.mxu0 0.0
      %431 = vmatprep.subr.mxu0 0.0
      %432 = vmatpush1.msra.mxu0 0.0
      %433 = vmatprep.subr.mxu0 0.0
      %434 = vmatpush1.msra.mxu0 0.0
      %435 = vmatprep.subr.mxu0 0.0
      %436 = vmatpush1.msra.mxu0 0.0
      %437 = vmatprep.subr.mxu0 0.0
      %438 = vmatpush1.msra.mxu0 0.0
      %439 = vmatprep.subr.mxu0 0.0
      %440 = vmatpush1.msra.mxu0 0.0
      %441 = vmatprep.subr.mxu0 0.0
      %442 = vmatpush1.msra.mxu0 0.0
      %443 = vmatprep.subr.mxu0 0.0
      %444 = vmatpush1.msra.mxu0 0.0
      %445 = vmatprep.subr.mxu0 0.0
      %446 = vmatpush1.msra.mxu0 0.0
      %447 = vmatprep.subr.mxu0 0.0
      %448 = vmatpush1.msra.mxu0 0.0
      %449 = vmatprep.subr.mxu0 0.0
      %450 = vmatpush1.msra.mxu0 0.0
      %451 = vmatprep.subr.mxu0 0.0
      %452 = vmatpush1.msra.mxu0 0.0
      %453 = vmatprep.subr.mxu0 0.0
      %454 = vmatpush1.msra.mxu0 0.0
      %455 = vmatprep.subr.mxu0 0.0
      %456 = vmatpush1.msra.mxu0 0.0
      %457 = vmatprep.subr.mxu0 0.0
      %458 = vmatpush1.msra.mxu0 0.0
      %459 = vmatprep.subr.mxu0 0.0
      %460 = vmatpush1.msra.mxu0 0.0
      %461 = vmatprep.subr.mxu0 0.0
      %462 = vmatpush1.msra.mxu0 0.0
      %463 = vmatprep.subr.mxu0 0.0
      %464 = vmatpush1.msra.mxu0 0.0
      %465 = vmatprep.subr.mxu0 0.0
      %466 = vmatpush1.msra.mxu0 0.0
      %467 = vmatprep.subr.mxu0 0.0
      %468 = vmatpush1.msra.mxu0 0.0
      %469 = vmatprep.subr.mxu0 0.0
      %470 = vmatpush1.msra.mxu0 0.0
      %471 = vmatprep.subr.mxu0 0.0
      %472 = vmatpush1.msra.mxu0 0.0
      %473 = vmatprep.subr.mxu0 0.0
      %474 = vmatpush1.msra.mxu0 0.0
      %475 = vmatprep.subr.mxu0 0.0
      %476 = vmatpush1.msra.mxu0 0.0
      %477 = vmatprep.subr.mxu0 0.0
      %478 = vmatpush1.msra.mxu0 0.0
      %479 = vmatprep.subr.mxu0 0.0
      %480 = vmatpush1.msra.mxu0 0.0
      %481 = vmatprep.subr.mxu0 0.0
      %482 = vmatpush1.msra.mxu0 0.0
      %483 = vmatprep.subr.mxu0 0.0
      %484 = vmatpush1.msra.mxu0 0.0
      %485 = vmatprep.subr.mxu0 0.0
      %486 = vmatpush1.msra.mxu0 0.0
      %487 = vmatprep.subr.mxu0 0.0
      %488 = vmatpush1.msra.mxu0 0.0
      %489 = vmatprep.mubr.f32.mxu0 0.0
      %490 = vmatmul.mubr.f32.gmra.mrb[0].mxu0 %v402
      %v491 = vpop.f32.mrb[0].mxu0
      %v492 = vadd.f32 %v363, %v491
      %v493 = vpop.f32.mrb[0].mxu0
      %494 = vmatprep.mubr.f32.mxu0 0.0
      %495 = vmatmul.mubr.f32.gmra.mrb[0].mxu0 %v405
      %v496 = vpop.f32.mrb[0].mxu0
      %v497 = vadd.f32 %v368, %v496
      %v498 = vpop.f32.mrb[0].mxu0
      %499 = vmatprep.mubr.f32.mxu0 0.0
      %500 = vmatmul.mubr.f32.gmra.mrb[0].mxu0 %v408
      %v501 = vpop.f32.mrb[0].mxu0
      %v502 = vadd.f32 %v373, %v501
      %v503 = vpop.f32.mrb[0].mxu0
      %504 = vmatprep.mubr.f32.mxu0 0.0
      %505 = vmatmul.mubr.f32.gmra.mrb[0].mxu0 %v411
      %v506 = vpop.f32.mrb[0].mxu0
      %v507 = vadd.f32 %v378, %v506
      %v508 = vpop.f32.mrb[0].mxu0
      %509 = vmatprep.mubr.f32.mxu0 0.0
      %510 = vmatmul.mubr.f32.gmra.mrb[0].mxu0 %v414
      %v511 = vpop.f32.mrb[0].mxu0
      %v512 = vadd.f32 %v383, %v511
      %v513 = vpop.f32.mrb[0].mxu0
      %514 = vmatprep.mubr.f32.mxu0 0.0
      %515 = vmatmul.mubr.f32.gmra.mrb[0].mxu0 %v417
      %v516 = vpop.f32.mrb[0].mxu0
      %v517 = vadd.f32 %v388, %v516
      %v518 = vpop.f32.mrb[0].mxu0
      %519 = vmatprep.mubr.f32.mxu0 0.0
      %520 = vmatmul.mubr.f32.gmra.mrb[0].mxu0 %v420
      %v521 = vpop.f32.mrb[0].mxu0
      %v522 = vadd.f32 %v393, %v521
      %v523 = vpop.f32.mrb[0].mxu0
      %524 = vmatprep.mubr.f32.mxu0 0.0
      %525 = vmatmul.mubr.f32.gmra.mrb[0].mxu0 %v423
      %v526 = vpop.f32.mrb[0].mxu0
      %v527 = vadd.f32 %v398, %v526
      %v528 = vpop.f32.mrb[0].mxu0
      %529 = vdwg.mxu0
      %v530 = vld [vmem:[%s3 + $0x10] sm:$0x1]
      %v531 = vlaneseq
      %v532 = vshrl.u32 %v531, 7
      %v533 = vsub.s32 0, %v532
      %v534 = vrot.slane %v530, %v533
      %v535 = vadd.f32 %v492, %v534
      %v536 = vadd.f32 %v497, %v534
      %v537 = vadd.f32 %v502, %v534
      %v538 = vadd.f32 %v507, %v534
      %v539 = vadd.f32 %v512, %v534
      %v540 = vadd.f32 %v517, %v534
      %v541 = vadd.f32 %v522, %v534
      %v542 = vadd.f32 %v527, %v534
      %v543 = vmax.f32 %v535, 0.0
      %v544 = vmax.f32 %v536, 0.0
      %v545 = vmax.f32 %v537, 0.0
      %v546 = vmax.f32 %v538, 0.0
      %v547 = vmax.f32 %v539, 0.0
      %v548 = vmax.f32 %v540, 0.0
      %v549 = vmax.f32 %v541, 0.0
      %v550 = vmax.f32 %v542, 0.0
      %v551 = vld [vmem:[%s3 + $0x18] sm:$0xff]
      %v552 = vld [vmem:[%s3 + $0x20] sm:$0xff]
      %v553 = vld [vmem:[%s3 + $0x28] sm:$0xff]
      %v554 = vld [vmem:[%s3 + $0x30] sm:$0xff]
      %v555 = vld [vmem:[%s3 + $0x38] sm:$0xff]
      %v556 = vld [vmem:[%s3 + $0x40] sm:$0xff]
      %v557 = vld [vmem:[%s3 + $0x48] sm:$0xff]
      %v558 = vld [vmem:[%s3 + $0x50] sm:$0xff]
      %v559 = vld [vmem:[%s3 + $0x58] sm:$0x1]
      %v560 = vlaneseq
      %v561 = vshrl.u32 %v560, 7
      %v562 = vsub.s32 0, %v561
      %v563 = vrot.slane %v559, %v562
      %vm564 = vcmask 523264
      %v566 = vsel %vm564, %v543, 0
      %v569 = vsel %vm564, %v544, 0
      %v572 = vsel %vm564, %v545, 0
      %v575 = vsel %vm564, %v546, 0
      %v578 = vsel %vm564, %v547, 0
      %v581 = vsel %vm564, %v548, 0
      %v584 = vsel %vm564, %v549, 0
      %v587 = vsel %vm564, %v550, 0
      %589 = vmatprep.subr.mxu0 0.0
      %590 = vmatpush1.msra.mxu0 %v551
      %591 = vmatprep.subr.mxu0 0.0
      %592 = vmatpush1.msra.mxu0 %v552
      %593 = vmatprep.subr.mxu0 0.0
      %594 = vmatpush1.msra.mxu0 %v553
      %595 = vmatprep.subr.mxu0 0.0
      %596 = vmatpush1.msra.mxu0 %v554
      %597 = vmatprep.subr.mxu0 0.0
      %598 = vmatpush1.msra.mxu0 %v555
      %599 = vmatprep.subr.mxu0 0.0
      %600 = vmatpush1.msra.mxu0 %v556
      %601 = vmatprep.subr.mxu0 0.0
      %602 = vmatpush1.msra.mxu0 %v557
      %603 = vmatprep.subr.mxu0 0.0
      %604 = vmatpush1.msra.mxu0 %v558
      %605 = vmatprep.subr.mxu0 0.0
      %606 = vmatpush1.msra.mxu0 0.0
      %607 = vmatprep.subr.mxu0 0.0
      %608 = vmatpush1.msra.mxu0 0.0
      %609 = vmatprep.subr.mxu0 0.0
      %610 = vmatpush1.msra.mxu0 0.0
      %611 = vmatprep.subr.mxu0 0.0
      %612 = vmatpush1.msra.mxu0 0.0
      %613 = vmatprep.subr.mxu0 0.0
      %614 = vmatpush1.msra.mxu0 0.0
      %615 = vmatprep.subr.mxu0 0.0
      %616 = vmatpush1.msra.mxu0 0.0
      %617 = vmatprep.subr.mxu0 0.0
      %618 = vmatpush1.msra.mxu0 0.0
      %619 = vmatprep.subr.mxu0 0.0
      %620 = vmatpush1.msra.mxu0 0.0
      %621 = vmatprep.subr.mxu0 0.0
      %622 = vmatpush1.msra.mxu0 0.0
      %623 = vmatprep.subr.mxu0 0.0
      %624 = vmatpush1.msra.mxu0 0.0
      %625 = vmatprep.subr.mxu0 0.0
      %626 = vmatpush1.msra.mxu0 0.0
      %627 = vmatprep.subr.mxu0 0.0
      %628 = vmatpush1.msra.mxu0 0.0
      %629 = vmatprep.subr.mxu0 0.0
      %630 = vmatpush1.msra.mxu0 0.0
      %631 = vmatprep.subr.mxu0 0.0
      %632 = vmatpush1.msra.mxu0 0.0
      %633 = vmatprep.subr.mxu0 0.0
      %634 = vmatpush1.msra.mxu0 0.0
      %635 = vmatprep.subr.mxu0 0.0
      %636 = vmatpush1.msra.mxu0 0.0
      %637 = vmatprep.subr.mxu0 0.0
      %638 = vmatpush1.msra.mxu0 0.0
      %639 = vmatprep.subr.mxu0 0.0
      %640 = vmatpush1.msra.mxu0 0.0
      %641 = vmatprep.subr.mxu0 0.0
      %642 = vmatpush1.msra.mxu0 0.0
      %643 = vmatprep.subr.mxu0 0.0
      %644 = vmatpush1.msra.mxu0 0.0
      %645 = vmatprep.subr.mxu0 0.0
      %646 = vmatpush1.msra.mxu0 0.0
      %647 = vmatprep.subr.mxu0 0.0
      %648 = vmatpush1.msra.mxu0 0.0
      %649 = vmatprep.subr.mxu0 0.0
      %650 = vmatpush1.msra.mxu0 0.0
      %651 = vmatprep.subr.mxu0 0.0
      %652 = vmatpush1.msra.mxu0 0.0
      %653 = vmatprep.mubr.f32.mxu0 0.0
      %654 = vmatmul.mubr.f32.gmra.mrb[0].mxu0 %v566
      %v655 = vpop.f32.mrb[0].mxu0
      %v656 = vadd.f32 %v563, %v655
      %v657 = vpop.f32.mrb[0].mxu0
      %658 = vmatprep.mubr.f32.mxu0 0.0
      %659 = vmatmul.mubr.f32.gmra.mrb[0].mxu0 %v569
      %v660 = vpop.f32.mrb[0].mxu0
      %v661 = vadd.f32 %v563, %v660
      %v662 = vpop.f32.mrb[0].mxu0
      %663 = vmatprep.mubr.f32.mxu0 0.0
      %664 = vmatmul.mubr.f32.gmra.mrb[0].mxu0 %v572
      %v665 = vpop.f32.mrb[0].mxu0
      %v666 = vadd.f32 %v563, %v665
      %v667 = vpop.f32.mrb[0].mxu0
      %668 = vmatprep.mubr.f32.mxu0 0.0
      %669 = vmatmul.mubr.f32.gmra.mrb[0].mxu0 %v575
      %v670 = vpop.f32.mrb[0].mxu0
      %v671 = vadd.f32 %v563, %v670
      %v672 = vpop.f32.mrb[0].mxu0
      %673 = vmatprep.mubr.f32.mxu0 0.0
      %674 = vmatmul.mubr.f32.gmra.mrb[0].mxu0 %v578
      %v675 = vpop.f32.mrb[0].mxu0
      %v676 = vadd.f32 %v563, %v675
      %v677 = vpop.f32.mrb[0].mxu0
      %678 = vmatprep.mubr.f32.mxu0 0.0
      %679 = vmatmul.mubr.f32.gmra.mrb[0].mxu0 %v581
      %v680 = vpop.f32.mrb[0].mxu0
      %v681 = vadd.f32 %v563, %v680
      %v682 = vpop.f32.mrb[0].mxu0
      %683 = vmatprep.mubr.f32.mxu0 0.0
      %684 = vmatmul.mubr.f32.gmra.mrb[0].mxu0 %v584
      %v685 = vpop.f32.mrb[0].mxu0
      %v686 = vadd.f32 %v563, %v685
      %v687 = vpop.f32.mrb[0].mxu0
      %688 = vmatprep.mubr.f32.mxu0 0.0
      %689 = vmatmul.mubr.f32.gmra.mrb[0].mxu0 %v587
      %v690 = vpop.f32.mrb[0].mxu0
      %v691 = vadd.f32 %v563, %v690
      %v692 = vpop.f32.mrb[0].mxu0
      %693 = vdwg.mxu0
      %v694 = vmax.f32 %v656, 0.0
      %v695 = vmax.f32 %v661, 0.0
      %v696 = vmax.f32 %v666, 0.0
      %v697 = vmax.f32 %v671, 0.0
      %v698 = vmax.f32 %v676, 0.0
      %v699 = vmax.f32 %v681, 0.0
      %v700 = vmax.f32 %v686, 0.0
      %v701 = vmax.f32 %v691, 0.0
      %v702 = vld [vmem:[%s3 + $0x60] sm:$0xff]
      %v703 = vld [vmem:[%s3 + $0x68] sm:$0xff]
      %v704 = vld [vmem:[%s3 + $0x70] sm:$0xff]
      %v705 = vld [vmem:[%s3 + $0x78] sm:$0xff]
      %v706 = vld [vmem:[%s3 + $0x80] sm:$0xff]
      %v707 = vld [vmem:[%s3 + $0x88] sm:$0xff]
      %v708 = vld [vmem:[%s3 + $0x90] sm:$0xff]
      %v709 = vld [vmem:[%s3 + $0x98] sm:$0xff]
      %v710 = vld [vmem:[%s3 + $0xa0] sm:$0x1]
      %v711 = vlaneseq
      %v712 = vshrl.u32 %v711, 7
      %v713 = vsub.s32 0, %v712
      %v714 = vrot.slane %v710, %v713
      %v716 = vsel %vm564, %v694, 0
      %v719 = vsel %vm564, %v695, 0
      %v722 = vsel %vm564, %v696, 0
      %v725 = vsel %vm564, %v697, 0
      %v728 = vsel %vm564, %v698, 0
      %v731 = vsel %vm564, %v699, 0
      %v734 = vsel %vm564, %v700, 0
      %v737 = vsel %vm564, %v701, 0
      %739 = vmatprep.subr.mxu0 0.0
      %740 = vmatpush1.msra.mxu0 %v702
      %741 = vmatprep.subr.mxu0 0.0
      %742 = vmatpush1.msra.mxu0 %v703
      %743 = vmatprep.subr.mxu0 0.0
      %744 = vmatpush1.msra.mxu0 %v704
      %745 = vmatprep.subr.mxu0 0.0
      %746 = vmatpush1.msra.mxu0 %v705
      %747 = vmatprep.subr.mxu0 0.0
      %748 = vmatpush1.msra.mxu0 %v706
      %749 = vmatprep.subr.mxu0 0.0
      %750 = vmatpush1.msra.mxu0 %v707
      %751 = vmatprep.subr.mxu0 0.0
      %752 = vmatpush1.msra.mxu0 %v708
      %753 = vmatprep.subr.mxu0 0.0
      %754 = vmatpush1.msra.mxu0 %v709
      %755 = vmatprep.subr.mxu0 0.0
      %756 = vmatpush1.msra.mxu0 0.0
      %757 = vmatprep.subr.mxu0 0.0
      %758 = vmatpush1.msra.mxu0 0.0
      %759 = vmatprep.subr.mxu0 0.0
      %760 = vmatpush1.msra.mxu0 0.0
      %761 = vmatprep.subr.mxu0 0.0
      %762 = vmatpush1.msra.mxu0 0.0
      %763 = vmatprep.subr.mxu0 0.0
      %764 = vmatpush1.msra.mxu0 0.0
      %765 = vmatprep.subr.mxu0 0.0
      %766 = vmatpush1.msra.mxu0 0.0
      %767 = vmatprep.subr.mxu0 0.0
      %768 = vmatpush1.msra.mxu0 0.0
      %769 = vmatprep.subr.mxu0 0.0
      %770 = vmatpush1.msra.mxu0 0.0
      %771 = vmatprep.subr.mxu0 0.0
      %772 = vmatpush1.msra.mxu0 0.0
      %773 = vmatprep.subr.mxu0 0.0
      %774 = vmatpush1.msra.mxu0 0.0
      %775 = vmatprep.subr.mxu0 0.0
      %776 = vmatpush1.msra.mxu0 0.0
      %777 = vmatprep.subr.mxu0 0.0
      %778 = vmatpush1.msra.mxu0 0.0
      %779 = vmatprep.subr.mxu0 0.0
      %780 = vmatpush1.msra.mxu0 0.0
      %781 = vmatprep.subr.mxu0 0.0
      %782 = vmatpush1.msra.mxu0 0.0
      %783 = vmatprep.subr.mxu0 0.0
      %784 = vmatpush1.msra.mxu0 0.0
      %785 = vmatprep.subr.mxu0 0.0
      %786 = vmatpush1.msra.mxu0 0.0
      %787 = vmatprep.subr.mxu0 0.0
      %788 = vmatpush1.msra.mxu0 0.0
      %789 = vmatprep.subr.mxu0 0.0
      %790 = vmatpush1.msra.mxu0 0.0
      %791 = vmatprep.subr.mxu0 0.0
      %792 = vmatpush1.msra.mxu0 0.0
      %793 = vmatprep.subr.mxu0 0.0
      %794 = vmatpush1.msra.mxu0 0.0
      %795 = vmatprep.subr.mxu0 0.0
      %796 = vmatpush1.msra.mxu0 0.0
      %797 = vmatprep.subr.mxu0 0.0
      %798 = vmatpush1.msra.mxu0 0.0
      %799 = vmatprep.subr.mxu0 0.0
      %800 = vmatpush1.msra.mxu0 0.0
      %801 = vmatprep.subr.mxu0 0.0
      %802 = vmatpush1.msra.mxu0 0.0
      %803 = vmatprep.mubr.f32.mxu0 0.0
      %804 = vmatmul.mubr.f32.gmra.mrb[0].mxu0 %v716
      %v805 = vpop.f32.mrb[0].mxu0
      %v806 = vadd.f32 %v714, %v805
      %v807 = vpop.f32.mrb[0].mxu0
      %808 = vmatprep.mubr.f32.mxu0 0.0
      %809 = vmatmul.mubr.f32.gmra.mrb[0].mxu0 %v719
      %v810 = vpop.f32.mrb[0].mxu0
      %v811 = vadd.f32 %v714, %v810
      %v812 = vpop.f32.mrb[0].mxu0
      %813 = vmatprep.mubr.f32.mxu0 0.0
      %814 = vmatmul.mubr.f32.gmra.mrb[0].mxu0 %v722
      %v815 = vpop.f32.mrb[0].mxu0
      %v816 = vadd.f32 %v714, %v815
      %v817 = vpop.f32.mrb[0].mxu0
      %818 = vmatprep.mubr.f32.mxu0 0.0
      %819 = vmatmul.mubr.f32.gmra.mrb[0].mxu0 %v725
      %v820 = vpop.f32.mrb[0].mxu0
      %v821 = vadd.f32 %v714, %v820
      %v822 = vpop.f32.mrb[0].mxu0
      %823 = vmatprep.mubr.f32.mxu0 0.0
      %824 = vmatmul.mubr.f32.gmra.mrb[0].mxu0 %v728
      %v825 = vpop.f32.mrb[0].mxu0
      %v826 = vadd.f32 %v714, %v825
      %v827 = vpop.f32.mrb[0].mxu0
      %828 = vmatprep.mubr.f32.mxu0 0.0
      %829 = vmatmul.mubr.f32.gmra.mrb[0].mxu0 %v731
      %v830 = vpop.f32.mrb[0].mxu0
      %v831 = vadd.f32 %v714, %v830
      %v832 = vpop.f32.mrb[0].mxu0
      %833 = vmatprep.mubr.f32.mxu0 0.0
      %834 = vmatmul.mubr.f32.gmra.mrb[0].mxu0 %v734
      %v835 = vpop.f32.mrb[0].mxu0
      %v836 = vadd.f32 %v714, %v835
      %v837 = vpop.f32.mrb[0].mxu0
      %838 = vmatprep.mubr.f32.mxu0 0.0
      %839 = vmatmul.mubr.f32.gmra.mrb[0].mxu0 %v737
      %v840 = vpop.f32.mrb[0].mxu0
      %v841 = vadd.f32 %v714, %v840
      %v842 = vpop.f32.mrb[0].mxu0
      %843 = vdwg.mxu0
      %v844 = vmul.f32 %v806, 1.442695
      %v845 = vpow.pop %v844
      %v846 = vmul.f32 %v811, 1.442695
      %v847 = vpow.pop %v846
      %v848 = vmul.f32 %v816, 1.442695
      %v849 = vpow.pop %v848
      %v850 = vmul.f32 %v821, 1.442695
      %v851 = vpow.pop %v850
      %v852 = vmul.f32 %v826, 1.442695
      %v853 = vpow.pop %v852
      %v854 = vmul.f32 %v831, 1.442695
      %v855 = vpow.pop %v854
      %v856 = vmul.f32 %v836, 1.442695
      %v857 = vpow.pop %v856
      %v858 = vmul.f32 %v841, 1.442695
      %v859 = vpow.pop %v858
      %868 = vrot.lane.b32.xlu0 %v261, 8
      %v869 = vpop.permute.xlu0 %868
      %870 = vrot.lane.b32.xlu0 %v262, 8
      %v871 = vpop.permute.xlu0 %870
      %872 = vrot.lane.b32.xlu0 %v263, 8
      %v873 = vpop.permute.xlu0 %872
      %874 = vrot.lane.b32.xlu0 %v264, 8
      %v875 = vpop.permute.xlu0 %874
      %876 = vrot.lane.b32.xlu0 %v265, 8
      %v877 = vpop.permute.xlu0 %876
      %878 = vrot.lane.b32.xlu0 %v266, 8
      %v879 = vpop.permute.xlu0 %878
      %880 = vrot.lane.b32.xlu0 %v267, 8
      %v881 = vpop.permute.xlu0 %880
      %882 = vrot.lane.b32.xlu0 %v268, 8
      %v883 = vpop.permute.xlu0 %882
      %v892 = vmul.f32 %v845, %v869
      %v893 = vmul.f32 %v847, %v871
      %v894 = vmul.f32 %v849, %v873
      %v895 = vmul.f32 %v851, %v875
      %v896 = vmul.f32 %v853, %v877
      %v897 = vmul.f32 %v855, %v879
      %v898 = vmul.f32 %v857, %v881
      %v899 = vmul.f32 %v859, %v883
      %908 = vrot.lane.b32.xlu0 %v806, 8
      %v909 = vpop.permute.xlu0 %908
      %910 = vrot.lane.b32.xlu0 %v811, 8
      %v911 = vpop.permute.xlu0 %910
      %912 = vrot.lane.b32.xlu0 %v816, 8
      %v913 = vpop.permute.xlu0 %912
      %914 = vrot.lane.b32.xlu0 %v821, 8
      %v915 = vpop.permute.xlu0 %914
      %916 = vrot.lane.b32.xlu0 %v826, 8
      %v917 = vpop.permute.xlu0 %916
      %918 = vrot.lane.b32.xlu0 %v831, 8
      %v919 = vpop.permute.xlu0 %918
      %920 = vrot.lane.b32.xlu0 %v836, 8
      %v921 = vpop.permute.xlu0 %920
      %922 = vrot.lane.b32.xlu0 %v841, 8
      %v923 = vpop.permute.xlu0 %922
      %v932 = vadd.f32 %v892, %v909
      %v933 = vadd.f32 %v893, %v911
      %v934 = vadd.f32 %v894, %v913
      %v935 = vadd.f32 %v895, %v915
      %v936 = vadd.f32 %v896, %v917
      %v937 = vadd.f32 %v897, %v919
      %v938 = vadd.f32 %v898, %v921
      %v939 = vadd.f32 %v899, %v923
      %v940 = vld [vmem:[%s3 + $0x150] sm:$0xff]
      %v941 = vld [vmem:[%s3 + $0x158] sm:$0x1]
      %v942 = vlaneseq
      %v943 = vshrl.u32 %v942, 7
      %v944 = vsub.s32 0, %v943
      %v945 = vrot.slane %v941, %v944
      %954 = vrot.lane.b32.xlu0 %v932, 120
      %v955 = vpop.permute.xlu0 %954
      %956 = vrot.lane.b32.xlu0 %v933, 120
      %v957 = vpop.permute.xlu0 %956
      %958 = vrot.lane.b32.xlu0 %v934, 120
      %v959 = vpop.permute.xlu0 %958
      %960 = vrot.lane.b32.xlu0 %v935, 120
      %v961 = vpop.permute.xlu0 %960
      %962 = vrot.lane.b32.xlu0 %v936, 120
      %v963 = vpop.permute.xlu0 %962
      %964 = vrot.lane.b32.xlu0 %v937, 120
      %v965 = vpop.permute.xlu0 %964
      %966 = vrot.lane.b32.xlu0 %v938, 120
      %v967 = vpop.permute.xlu0 %966
      %968 = vrot.lane.b32.xlu0 %v939, 120
      %v969 = vpop.permute.xlu0 %968
      %v970 = vsel %vm271, %v955, 0
      %v972 = vsel %vm271, %v957, 0
      %v974 = vsel %vm271, %v959, 0
      %v976 = vsel %vm271, %v961, 0
      %v978 = vsel %vm271, %v963, 0
      %v980 = vsel %vm271, %v965, 0
      %v982 = vsel %vm271, %v967, 0
      %v984 = vsel %vm271, %v969, 0
      %986 = vmatprep.subr.mxu0 0.0
      %987 = vmatpush1.msra.mxu0 %v940
      %988 = vmatprep.subr.mxu0 0.0
      %989 = vmatpush1.msra.mxu0 0.0
      %990 = vmatprep.subr.mxu0 0.0
      %991 = vmatpush1.msra.mxu0 0.0
      %992 = vmatprep.subr.mxu0 0.0
      %993 = vmatpush1.msra.mxu0 0.0
      %994 = vmatprep.subr.mxu0 0.0
      %995 = vmatpush1.msra.mxu0 0.0
      %996 = vmatprep.subr.mxu0 0.0
      %997 = vmatpush1.msra.mxu0 0.0
      %998 = vmatprep.subr.mxu0 0.0
      %999 = vmatpush1.msra.mxu0 0.0
      %1000 = vmatprep.subr.mxu0 0.0
      %1001 = vmatpush1.msra.mxu0 0.0
      %1002 = vmatprep.subr.mxu0 0.0
      %1003 = vmatpush1.msra.mxu0 0.0
      %1004 = vmatprep.subr.mxu0 0.0
      %1005 = vmatpush1.msra.mxu0 0.0
      %1006 = vmatprep.subr.mxu0 0.0
      %1007 = vmatpush1.msra.mxu0 0.0
      %1008 = vmatprep.subr.mxu0 0.0
      %1009 = vmatpush1.msra.mxu0 0.0
      %1010 = vmatprep.subr.mxu0 0.0
      %1011 = vmatpush1.msra.mxu0 0.0
      %1012 = vmatprep.subr.mxu0 0.0
      %1013 = vmatpush1.msra.mxu0 0.0
      %1014 = vmatprep.subr.mxu0 0.0
      %1015 = vmatpush1.msra.mxu0 0.0
      %1016 = vmatprep.subr.mxu0 0.0
      %1017 = vmatpush1.msra.mxu0 0.0
      %1018 = vmatprep.subr.mxu0 0.0
      %1019 = vmatpush1.msra.mxu0 0.0
      %1020 = vmatprep.subr.mxu0 0.0
      %1021 = vmatpush1.msra.mxu0 0.0
      %1022 = vmatprep.subr.mxu0 0.0
      %1023 = vmatpush1.msra.mxu0 0.0
      %1024 = vmatprep.subr.mxu0 0.0
      %1025 = vmatpush1.msra.mxu0 0.0
      %1026 = vmatprep.subr.mxu0 0.0
      %1027 = vmatpush1.msra.mxu0 0.0
      %1028 = vmatprep.subr.mxu0 0.0
      %1029 = vmatpush1.msra.mxu0 0.0
      %1030 = vmatprep.subr.mxu0 0.0
      %1031 = vmatpush1.msra.mxu0 0.0
      %1032 = vmatprep.subr.mxu0 0.0
      %1033 = vmatpush1.msra.mxu0 0.0
      %1034 = vmatprep.subr.mxu0 0.0
      %1035 = vmatpush1.msra.mxu0 0.0
      %1036 = vmatprep.subr.mxu0 0.0
      %1037 = vmatpush1.msra.mxu0 0.0
      %1038 = vmatprep.subr.mxu0 0.0
      %1039 = vmatpush1.msra.mxu0 0.0
      %1040 = vmatprep.subr.mxu0 0.0
      %1041 = vmatpush1.msra.mxu0 0.0
      %1042 = vmatprep.subr.mxu0 0.0
      %1043 = vmatpush1.msra.mxu0 0.0
      %1044 = vmatprep.subr.mxu0 0.0
      %1045 = vmatpush1.msra.mxu0 0.0
      %1046 = vmatprep.subr.mxu0 0.0
      %1047 = vmatpush1.msra.mxu0 0.0
      %1048 = vmatprep.subr.mxu0 0.0
      %1049 = vmatpush1.msra.mxu0 0.0
      %1050 = vmatprep.mubr.f32.mxu0 0.0
      %1051 = vmatmul.mubr.f32.gmra.mrb[0].mxu0 %v970
      %v1052 = vpop.f32.mrb[0].mxu0
      %v1053 = vadd.f32 %v945, %v1052
      %v1054 = vpop.f32.mrb[0].mxu0
      %1055 = vmatprep.mubr.f32.mxu0 0.0
      %1056 = vmatmul.mubr.f32.gmra.mrb[0].mxu0 %v972
      %v1057 = vpop.f32.mrb[0].mxu0
      %v1058 = vadd.f32 %v945, %v1057
      %v1059 = vpop.f32.mrb[0].mxu0
      %1060 = vmatprep.mubr.f32.mxu0 0.0
      %1061 = vmatmul.mubr.f32.gmra.mrb[0].mxu0 %v974
      %v1062 = vpop.f32.mrb[0].mxu0
      %v1063 = vadd.f32 %v945, %v1062
      %v1064 = vpop.f32.mrb[0].mxu0
      %1065 = vmatprep.mubr.f32.mxu0 0.0
      %1066 = vmatmul.mubr.f32.gmra.mrb[0].mxu0 %v976
      %v1067 = vpop.f32.mrb[0].mxu0
      %v1068 = vadd.f32 %v945, %v1067
      %v1069 = vpop.f32.mrb[0].mxu0
      %1070 = vmatprep.mubr.f32.mxu0 0.0
      %1071 = vmatmul.mubr.f32.gmra.mrb[0].mxu0 %v978
      %v1072 = vpop.f32.mrb[0].mxu0
      %v1073 = vadd.f32 %v945, %v1072
      %v1074 = vpop.f32.mrb[0].mxu0
      %1075 = vmatprep.mubr.f32.mxu0 0.0
      %1076 = vmatmul.mubr.f32.gmra.mrb[0].mxu0 %v980
      %v1077 = vpop.f32.mrb[0].mxu0
      %v1078 = vadd.f32 %v945, %v1077
      %v1079 = vpop.f32.mrb[0].mxu0
      %1080 = vmatprep.mubr.f32.mxu0 0.0
      %1081 = vmatmul.mubr.f32.gmra.mrb[0].mxu0 %v982
      %v1082 = vpop.f32.mrb[0].mxu0
      %v1083 = vadd.f32 %v945, %v1082
      %v1084 = vpop.f32.mrb[0].mxu0
      %1085 = vmatprep.mubr.f32.mxu0 0.0
      %1086 = vmatmul.mubr.f32.gmra.mrb[0].mxu0 %v984
      %v1087 = vpop.f32.mrb[0].mxu0
      %v1088 = vadd.f32 %v945, %v1087
      %v1089 = vpop.f32.mrb[0].mxu0
      %1090 = vdwg.mxu0
      %v1091 = vmul.f32 %v1053, 1.442695
      %v1092 = vpow.pop %v1091
      %v1093 = vmul.f32 %v1058, 1.442695
      %v1094 = vpow.pop %v1093
      %v1095 = vmul.f32 %v1063, 1.442695
      %v1096 = vpow.pop %v1095
      %v1097 = vmul.f32 %v1068, 1.442695
      %v1098 = vpow.pop %v1097
      %v1099 = vmul.f32 %v1073, 1.442695
      %v1100 = vpow.pop %v1099
      %v1101 = vmul.f32 %v1078, 1.442695
      %v1102 = vpow.pop %v1101
      %v1103 = vmul.f32 %v1083, 1.442695
      %v1104 = vpow.pop %v1103
      %v1105 = vmul.f32 %v1088, 1.442695
      %v1106 = vpow.pop %v1105
      %v1107 = vmul.f32 %v245, %v1092
      %v1108 = vmul.f32 %v246, %v1094
      %v1109 = vmul.f32 %v247, %v1096
      %v1110 = vmul.f32 %v248, %v1098
      %v1111 = vmul.f32 %v249, %v1100
      %v1112 = vmul.f32 %v250, %v1102
      %v1113 = vmul.f32 %v251, %v1104
      %v1114 = vmul.f32 %v252, %v1106
      %1123 = vrot.lane.b32.xlu0 %v1053, 120
      %v1124 = vpop.permute.xlu0 %1123
      %1125 = vrot.lane.b32.xlu0 %v1058, 120
      %v1126 = vpop.permute.xlu0 %1125
      %1127 = vrot.lane.b32.xlu0 %v1063, 120
      %v1128 = vpop.permute.xlu0 %1127
      %1129 = vrot.lane.b32.xlu0 %v1068, 120
      %v1130 = vpop.permute.xlu0 %1129
      %1131 = vrot.lane.b32.xlu0 %v1073, 120
      %v1132 = vpop.permute.xlu0 %1131
      %1133 = vrot.lane.b32.xlu0 %v1078, 120
      %v1134 = vpop.permute.xlu0 %1133
      %1135 = vrot.lane.b32.xlu0 %v1083, 120
      %v1136 = vpop.permute.xlu0 %1135
      %1137 = vrot.lane.b32.xlu0 %v1088, 120
      %v1138 = vpop.permute.xlu0 %1137
      %v1147 = vadd.f32 %v1107, %v1124
      %v1148 = vadd.f32 %v1108, %v1126
      %v1149 = vadd.f32 %v1109, %v1128
      %v1150 = vadd.f32 %v1110, %v1130
      %v1151 = vadd.f32 %v1111, %v1132
      %v1152 = vadd.f32 %v1112, %v1134
      %v1153 = vadd.f32 %v1113, %v1136
      %v1154 = vadd.f32 %v1114, %v1138
      %v1155 = vld [vmem:[%s3 + $0xa8] sm:$0xff]
      %v1156 = vld [vmem:[%s3 + $0xb0] sm:$0xff]
      %1157 = vmatprep.subr.mxu0 0.0
      %1158 = vmatpush1.msra.mxu0 %v1156
      %1159 = vmatprep.subr.mxu0 0.0
      %1160 = vmatpush1.msra.mxu0 0.0
      %1161 = vmatprep.subr.mxu0 0.0
      %1162 = vmatpush1.msra.mxu0 0.0
      %1163 = vmatprep.subr.mxu0 0.0
      %1164 = vmatpush1.msra.mxu0 0.0
      %1165 = vmatprep.subr.mxu0 0.0
      %1166 = vmatpush1.msra.mxu0 0.0
      %1167 = vmatprep.subr.mxu0 0.0
      %1168 = vmatpush1.msra.mxu0 0.0
      %1169 = vmatprep.subr.mxu0 0.0
      %1170 = vmatpush1.msra.mxu0 0.0
      %1171 = vmatprep.subr.mxu0 0.0
      %1172 = vmatpush1.msra.mxu0 0.0
      %1173 = vmatprep.subr.mxu0 0.0
      %1174 = vmatpush1.msra.mxu0 0.0
      %1175 = vmatprep.subr.mxu0 0.0
      %1176 = vmatpush1.msra.mxu0 0.0
      %1177 = vmatprep.subr.mxu0 0.0
      %1178 = vmatpush1.msra.mxu0 0.0
      %1179 = vmatprep.subr.mxu0 0.0
      %1180 = vmatpush1.msra.mxu0 0.0
      %1181 = vmatprep.subr.mxu0 0.0
      %1182 = vmatpush1.msra.mxu0 0.0
      %1183 = vmatprep.subr.mxu0 0.0
      %1184 = vmatpush1.msra.mxu0 0.0
      %1185 = vmatprep.subr.mxu0 0.0
      %1186 = vmatpush1.msra.mxu0 0.0
      %1187 = vmatprep.subr.mxu0 0.0
      %1188 = vmatpush1.msra.mxu0 0.0
      %1189 = vmatprep.subr.mxu0 0.0
      %1190 = vmatpush1.msra.mxu0 0.0
      %1191 = vmatprep.subr.mxu0 0.0
      %1192 = vmatpush1.msra.mxu0 0.0
      %1193 = vmatprep.subr.mxu0 0.0
      %1194 = vmatpush1.msra.mxu0 0.0
      %1195 = vmatprep.subr.mxu0 0.0
      %1196 = vmatpush1.msra.mxu0 0.0
      %1197 = vmatprep.subr.mxu0 0.0
      %1198 = vmatpush1.msra.mxu0 0.0
      %1199 = vmatprep.subr.mxu0 0.0
      %1200 = vmatpush1.msra.mxu0 0.0
      %1201 = vmatprep.subr.mxu0 0.0
      %1202 = vmatpush1.msra.mxu0 0.0
      %1203 = vmatprep.subr.mxu0 0.0
      %1204 = vmatpush1.msra.mxu0 0.0
      %1205 = vmatprep.subr.mxu0 0.0
      %1206 = vmatpush1.msra.mxu0 0.0
      %1207 = vmatprep.subr.mxu0 0.0
      %1208 = vmatpush1.msra.mxu0 0.0
      %1209 = vmatprep.subr.mxu0 0.0
      %1210 = vmatpush1.msra.mxu0 0.0
      %1211 = vmatprep.subr.mxu0 0.0
      %1212 = vmatpush1.msra.mxu0 0.0
      %1213 = vmatprep.subr.mxu0 0.0
      %1214 = vmatpush1.msra.mxu0 0.0
      %1215 = vmatprep.subr.mxu0 0.0
      %1216 = vmatpush1.msra.mxu0 0.0
      %1217 = vmatprep.subr.mxu0 0.0
      %1218 = vmatpush1.msra.mxu0 0.0
      %1219 = vmatprep.subr.mxu0 0.0
      %1220 = vmatpush1.msra.mxu0 0.0
      %1221 = vmatprep.mubr.f32.mxu0 0.0
      %1222 = vmatmul.mubr.f32.gmra.mrb[0].mxu0 %v273
      %v1223 = vpop.f32.mrb[0].mxu0
      %v1224 = vadd.f32 0.0, %v1223
      %v1225 = vpop.f32.mrb[0].mxu0
      %1226 = vmatprep.mubr.f32.mxu0 0.0
      %1227 = vmatmul.mubr.f32.gmra.mrb[0].mxu0 %v276
      %v1228 = vpop.f32.mrb[0].mxu0
      %v1229 = vadd.f32 0.0, %v1228
      %v1230 = vpop.f32.mrb[0].mxu0
      %1231 = vmatprep.mubr.f32.mxu0 0.0
      %1232 = vmatmul.mubr.f32.gmra.mrb[0].mxu0 %v279
      %v1233 = vpop.f32.mrb[0].mxu0
      %v1234 = vadd.f32 0.0, %v1233
      %v1235 = vpop.f32.mrb[0].mxu0
      %1236 = vmatprep.mubr.f32.mxu0 0.0
      %1237 = vmatmul.mubr.f32.gmra.mrb[0].mxu0 %v282
      %v1238 = vpop.f32.mrb[0].mxu0
      %v1239 = vadd.f32 0.0, %v1238
      %v1240 = vpop.f32.mrb[0].mxu0
      %1241 = vmatprep.mubr.f32.mxu0 0.0
      %1242 = vmatmul.mubr.f32.gmra.mrb[0].mxu0 %v285
      %v1243 = vpop.f32.mrb[0].mxu0
      %v1244 = vadd.f32 0.0, %v1243
      %v1245 = vpop.f32.mrb[0].mxu0
      %1246 = vmatprep.mubr.f32.mxu0 0.0
      %1247 = vmatmul.mubr.f32.gmra.mrb[0].mxu0 %v288
      %v1248 = vpop.f32.mrb[0].mxu0
      %v1249 = vadd.f32 0.0, %v1248
      %v1250 = vpop.f32.mrb[0].mxu0
      %1251 = vmatprep.mubr.f32.mxu0 0.0
      %1252 = vmatmul.mubr.f32.gmra.mrb[0].mxu0 %v291
      %v1253 = vpop.f32.mrb[0].mxu0
      %v1254 = vadd.f32 0.0, %v1253
      %v1255 = vpop.f32.mrb[0].mxu0
      %1256 = vmatprep.mubr.f32.mxu0 0.0
      %1257 = vmatmul.mubr.f32.gmra.mrb[0].mxu0 %v294
      %v1258 = vpop.f32.mrb[0].mxu0
      %v1259 = vadd.f32 0.0, %v1258
      %v1260 = vpop.f32.mrb[0].mxu0
      %1261 = vdwg.mxu0
      %v1263 = vsel %vm271, %v1147, 0
      %v1266 = vsel %vm271, %v1148, 0
      %v1269 = vsel %vm271, %v1149, 0
      %v1272 = vsel %vm271, %v1150, 0
      %v1275 = vsel %vm271, %v1151, 0
      %v1278 = vsel %vm271, %v1152, 0
      %v1281 = vsel %vm271, %v1153, 0
      %v1284 = vsel %vm271, %v1154, 0
      %1286 = vmatprep.subr.mxu0 0.0
      %1287 = vmatpush1.msra.mxu0 %v1155
      %1288 = vmatprep.subr.mxu0 0.0
      %1289 = vmatpush1.msra.mxu0 0.0
      %1290 = vmatprep.subr.mxu0 0.0
      %1291 = vmatpush1.msra.mxu0 0.0
      %1292 = vmatprep.subr.mxu0 0.0
      %1293 = vmatpush1.msra.mxu0 0.0
      %1294 = vmatprep.subr.mxu0 0.0
      %1295 = vmatpush1.msra.mxu0 0.0
      %1296 = vmatprep.subr.mxu0 0.0
      %1297 = vmatpush1.msra.mxu0 0.0
      %1298 = vmatprep.subr.mxu0 0.0
      %1299 = vmatpush1.msra.mxu0 0.0
      %1300 = vmatprep.subr.mxu0 0.0
      %1301 = vmatpush1.msra.mxu0 0.0
      %1302 = vmatprep.subr.mxu0 0.0
      %1303 = vmatpush1.msra.mxu0 0.0
      %1304 = vmatprep.subr.mxu0 0.0
      %1305 = vmatpush1.msra.mxu0 0.0
      %1306 = vmatprep.subr.mxu0 0.0
      %1307 = vmatpush1.msra.mxu0 0.0
      %1308 = vmatprep.subr.mxu0 0.0
      %1309 = vmatpush1.msra.mxu0 0.0
      %1310 = vmatprep.subr.mxu0 0.0
      %1311 = vmatpush1.msra.mxu0 0.0
      %1312 = vmatprep.subr.mxu0 0.0
      %1313 = vmatpush1.msra.mxu0 0.0
      %1314 = vmatprep.subr.mxu0 0.0
      %1315 = vmatpush1.msra.mxu0 0.0
      %1316 = vmatprep.subr.mxu0 0.0
      %1317 = vmatpush1.msra.mxu0 0.0
      %1318 = vmatprep.subr.mxu0 0.0
      %1319 = vmatpush1.msra.mxu0 0.0
      %1320 = vmatprep.subr.mxu0 0.0
      %1321 = vmatpush1.msra.mxu0 0.0
      %1322 = vmatprep.subr.mxu0 0.0
      %1323 = vmatpush1.msra.mxu0 0.0
      %1324 = vmatprep.subr.mxu0 0.0
      %1325 = vmatpush1.msra.mxu0 0.0
      %1326 = vmatprep.subr.mxu0 0.0
      %1327 = vmatpush1.msra.mxu0 0.0
      %1328 = vmatprep.subr.mxu0 0.0
      %1329 = vmatpush1.msra.mxu0 0.0
      %1330 = vmatprep.subr.mxu0 0.0
      %1331 = vmatpush1.msra.mxu0 0.0
      %1332 = vmatprep.subr.mxu0 0.0
      %1333 = vmatpush1.msra.mxu0 0.0
      %1334 = vmatprep.subr.mxu0 0.0
      %1335 = vmatpush1.msra.mxu0 0.0
      %1336 = vmatprep.subr.mxu0 0.0
      %1337 = vmatpush1.msra.mxu0 0.0
      %1338 = vmatprep.subr.mxu0 0.0
      %1339 = vmatpush1.msra.mxu0 0.0
      %1340 = vmatprep.subr.mxu0 0.0
      %1341 = vmatpush1.msra.mxu0 0.0
      %1342 = vmatprep.subr.mxu0 0.0
      %1343 = vmatpush1.msra.mxu0 0.0
      %1344 = vmatprep.subr.mxu0 0.0
      %1345 = vmatpush1.msra.mxu0 0.0
      %1346 = vmatprep.subr.mxu0 0.0
      %1347 = vmatpush1.msra.mxu0 0.0
      %1348 = vmatprep.subr.mxu0 0.0
      %1349 = vmatpush1.msra.mxu0 0.0
      %1350 = vmatprep.mubr.f32.mxu0 0.0
      %1351 = vmatmul.mubr.f32.gmra.mrb[0].mxu0 %v1263
      %v1352 = vpop.f32.mrb[0].mxu0
      %v1353 = vadd.f32 %v1224, %v1352
      %v1354 = vpop.f32.mrb[0].mxu0
      %1355 = vmatprep.mubr.f32.mxu0 0.0
      %1356 = vmatmul.mubr.f32.gmra.mrb[0].mxu0 %v1266
      %v1357 = vpop.f32.mrb[0].mxu0
      %v1358 = vadd.f32 %v1229, %v1357
      %v1359 = vpop.f32.mrb[0].mxu0
      %1360 = vmatprep.mubr.f32.mxu0 0.0
      %1361 = vmatmul.mubr.f32.gmra.mrb[0].mxu0 %v1269
      %v1362 = vpop.f32.mrb[0].mxu0
      %v1363 = vadd.f32 %v1234, %v1362
      %v1364 = vpop.f32.mrb[0].mxu0
      %1365 = vmatprep.mubr.f32.mxu0 0.0
      %1366 = vmatmul.mubr.f32.gmra.mrb[0].mxu0 %v1272
      %v1367 = vpop.f32.mrb[0].mxu0
      %v1368 = vadd.f32 %v1239, %v1367
      %v1369 = vpop.f32.mrb[0].mxu0
      %1370 = vmatprep.mubr.f32.mxu0 0.0
      %1371 = vmatmul.mubr.f32.gmra.mrb[0].mxu0 %v1275
      %v1372 = vpop.f32.mrb[0].mxu0
      %v1373 = vadd.f32 %v1244, %v1372
      %v1374 = vpop.f32.mrb[0].mxu0
      %1375 = vmatprep.mubr.f32.mxu0 0.0
      %1376 = vmatmul.mubr.f32.gmra.mrb[0].mxu0 %v1278
      %v1377 = vpop.f32.mrb[0].mxu0
      %v1378 = vadd.f32 %v1249, %v1377
      %v1379 = vpop.f32.mrb[0].mxu0
      %1380 = vmatprep.mubr.f32.mxu0 0.0
      %1381 = vmatmul.mubr.f32.gmra.mrb[0].mxu0 %v1281
      %v1382 = vpop.f32.mrb[0].mxu0
      %v1383 = vadd.f32 %v1254, %v1382
      %v1384 = vpop.f32.mrb[0].mxu0
      %1385 = vmatprep.mubr.f32.mxu0 0.0
      %1386 = vmatmul.mubr.f32.gmra.mrb[0].mxu0 %v1284
      %v1387 = vpop.f32.mrb[0].mxu0
      %v1388 = vadd.f32 %v1259, %v1387
      %v1389 = vpop.f32.mrb[0].mxu0
      %1390 = vdwg.mxu0
      %v1391 = vld [vmem:[%s3 + $0xb8] sm:$0x1]
      %v1392 = vlaneseq
      %v1393 = vshrl.u32 %v1392, 7
      %v1394 = vsub.s32 0, %v1393
      %v1395 = vrot.slane %v1391, %v1394
      %v1396 = vadd.f32 %v1353, %v1395
      %v1397 = vadd.f32 %v1358, %v1395
      %v1398 = vadd.f32 %v1363, %v1395
      %v1399 = vadd.f32 %v1368, %v1395
      %v1400 = vadd.f32 %v1373, %v1395
      %v1401 = vadd.f32 %v1378, %v1395
      %v1402 = vadd.f32 %v1383, %v1395
      %v1403 = vadd.f32 %v1388, %v1395
      %v1404 = vmax.f32 %v1396, 0.0
      %v1405 = vmax.f32 %v1397, 0.0
      %v1406 = vmax.f32 %v1398, 0.0
      %v1407 = vmax.f32 %v1399, 0.0
      %v1408 = vmax.f32 %v1400, 0.0
      %v1409 = vmax.f32 %v1401, 0.0
      %v1410 = vmax.f32 %v1402, 0.0
      %v1411 = vmax.f32 %v1403, 0.0
      %v1412 = vld [vmem:[%s3 + $0xc0] sm:$0xff]
      %v1413 = vld [vmem:[%s3 + $0xc8] sm:$0xff]
      %v1414 = vld [vmem:[%s3 + $0xd0] sm:$0xff]
      %v1415 = vld [vmem:[%s3 + $0xd8] sm:$0xff]
      %v1416 = vld [vmem:[%s3 + $0xe0] sm:$0xff]
      %v1417 = vld [vmem:[%s3 + $0xe8] sm:$0xff]
      %v1418 = vld [vmem:[%s3 + $0xf0] sm:$0xff]
      %v1419 = vld [vmem:[%s3 + $0xf8] sm:$0xff]
      %v1420 = vld [vmem:[%s3 + $0x100] sm:$0x1]
      %v1421 = vlaneseq
      %v1422 = vshrl.u32 %v1421, 7
      %v1423 = vsub.s32 0, %v1422
      %v1424 = vrot.slane %v1420, %v1423
      %v1426 = vsel %vm564, %v1404, 0
      %v1429 = vsel %vm564, %v1405, 0
      %v1432 = vsel %vm564, %v1406, 0
      %v1435 = vsel %vm564, %v1407, 0
      %v1438 = vsel %vm564, %v1408, 0
      %v1441 = vsel %vm564, %v1409, 0
      %v1444 = vsel %vm564, %v1410, 0
      %v1447 = vsel %vm564, %v1411, 0
      %1449 = vmatprep.subr.mxu0 0.0
      %1450 = vmatpush1.msra.mxu0 %v1412
      %1451 = vmatprep.subr.mxu0 0.0
      %1452 = vmatpush1.msra.mxu0 %v1413
      %1453 = vmatprep.subr.mxu0 0.0
      %1454 = vmatpush1.msra.mxu0 %v1414
      %1455 = vmatprep.subr.mxu0 0.0
      %1456 = vmatpush1.msra.mxu0 %v1415
      %1457 = vmatprep.subr.mxu0 0.0
      %1458 = vmatpush1.msra.mxu0 %v1416
      %1459 = vmatprep.subr.mxu0 0.0
      %1460 = vmatpush1.msra.mxu0 %v1417
      %1461 = vmatprep.subr.mxu0 0.0
      %1462 = vmatpush1.msra.mxu0 %v1418
      %1463 = vmatprep.subr.mxu0 0.0
      %1464 = vmatpush1.msra.mxu0 %v1419
      %1465 = vmatprep.subr.mxu0 0.0
      %1466 = vmatpush1.msra.mxu0 0.0
      %1467 = vmatprep.subr.mxu0 0.0
      %1468 = vmatpush1.msra.mxu0 0.0
      %1469 = vmatprep.subr.mxu0 0.0
      %1470 = vmatpush1.msra.mxu0 0.0
      %1471 = vmatprep.subr.mxu0 0.0
      %1472 = vmatpush1.msra.mxu0 0.0
      %1473 = vmatprep.subr.mxu0 0.0
      %1474 = vmatpush1.msra.mxu0 0.0
      %1475 = vmatprep.subr.mxu0 0.0
      %1476 = vmatpush1.msra.mxu0 0.0
      %1477 = vmatprep.subr.mxu0 0.0
      %1478 = vmatpush1.msra.mxu0 0.0
      %1479 = vmatprep.subr.mxu0 0.0
      %1480 = vmatpush1.msra.mxu0 0.0
      %1481 = vmatprep.subr.mxu0 0.0
      %1482 = vmatpush1.msra.mxu0 0.0
      %1483 = vmatprep.subr.mxu0 0.0
      %1484 = vmatpush1.msra.mxu0 0.0
      %1485 = vmatprep.subr.mxu0 0.0
      %1486 = vmatpush1.msra.mxu0 0.0
      %1487 = vmatprep.subr.mxu0 0.0
      %1488 = vmatpush1.msra.mxu0 0.0
      %1489 = vmatprep.subr.mxu0 0.0
      %1490 = vmatpush1.msra.mxu0 0.0
      %1491 = vmatprep.subr.mxu0 0.0
      %1492 = vmatpush1.msra.mxu0 0.0
      %1493 = vmatprep.subr.mxu0 0.0
      %1494 = vmatpush1.msra.mxu0 0.0
      %1495 = vmatprep.subr.mxu0 0.0
      %1496 = vmatpush1.msra.mxu0 0.0
      %1497 = vmatprep.subr.mxu0 0.0
      %1498 = vmatpush1.msra.mxu0 0.0
      %1499 = vmatprep.subr.mxu0 0.0
      %1500 = vmatpush1.msra.mxu0 0.0
      %1501 = vmatprep.subr.mxu0 0.0
      %1502 = vmatpush1.msra.mxu0 0.0
      %1503 = vmatprep.subr.mxu0 0.0
      %1504 = vmatpush1.msra.mxu0 0.0
      %1505 = vmatprep.subr.mxu0 0.0
      %1506 = vmatpush1.msra.mxu0 0.0
      %1507 = vmatprep.subr.mxu0 0.0
      %1508 = vmatpush1.msra.mxu0 0.0
      %1509 = vmatprep.subr.mxu0 0.0
      %1510 = vmatpush1.msra.mxu0 0.0
      %1511 = vmatprep.subr.mxu0 0.0
      %1512 = vmatpush1.msra.mxu0 0.0
      %1513 = vmatprep.mubr.f32.mxu0 0.0
      %1514 = vmatmul.mubr.f32.gmra.mrb[0].mxu0 %v1426
      %v1515 = vpop.f32.mrb[0].mxu0
      %v1516 = vadd.f32 %v1424, %v1515
      %v1517 = vpop.f32.mrb[0].mxu0
      %1518 = vmatprep.mubr.f32.mxu0 0.0
      %1519 = vmatmul.mubr.f32.gmra.mrb[0].mxu0 %v1429
      %v1520 = vpop.f32.mrb[0].mxu0
      %v1521 = vadd.f32 %v1424, %v1520
      %v1522 = vpop.f32.mrb[0].mxu0
      %1523 = vmatprep.mubr.f32.mxu0 0.0
      %1524 = vmatmul.mubr.f32.gmra.mrb[0].mxu0 %v1432
      %v1525 = vpop.f32.mrb[0].mxu0
      %v1526 = vadd.f32 %v1424, %v1525
      %v1527 = vpop.f32.mrb[0].mxu0
      %1528 = vmatprep.mubr.f32.mxu0 0.0
      %1529 = vmatmul.mubr.f32.gmra.mrb[0].mxu0 %v1435
      %v1530 = vpop.f32.mrb[0].mxu0
      %v1531 = vadd.f32 %v1424, %v1530
      %v1532 = vpop.f32.mrb[0].mxu0
      %1533 = vmatprep.mubr.f32.mxu0 0.0
      %1534 = vmatmul.mubr.f32.gmra.mrb[0].mxu0 %v1438
      %v1535 = vpop.f32.mrb[0].mxu0
      %v1536 = vadd.f32 %v1424, %v1535
      %v1537 = vpop.f32.mrb[0].mxu0
      %1538 = vmatprep.mubr.f32.mxu0 0.0
      %1539 = vmatmul.mubr.f32.gmra.mrb[0].mxu0 %v1441
      %v1540 = vpop.f32.mrb[0].mxu0
      %v1541 = vadd.f32 %v1424, %v1540
      %v1542 = vpop.f32.mrb[0].mxu0
      %1543 = vmatprep.mubr.f32.mxu0 0.0
      %1544 = vmatmul.mubr.f32.gmra.mrb[0].mxu0 %v1444
      %v1545 = vpop.f32.mrb[0].mxu0
      %v1546 = vadd.f32 %v1424, %v1545
      %v1547 = vpop.f32.mrb[0].mxu0
      %1548 = vmatprep.mubr.f32.mxu0 0.0
      %1549 = vmatmul.mubr.f32.gmra.mrb[0].mxu0 %v1447
      %v1550 = vpop.f32.mrb[0].mxu0
      %v1551 = vadd.f32 %v1424, %v1550
      %v1552 = vpop.f32.mrb[0].mxu0
      %1553 = vdwg.mxu0
      %v1554 = vmax.f32 %v1516, 0.0
      %v1555 = vmax.f32 %v1521, 0.0
      %v1556 = vmax.f32 %v1526, 0.0
      %v1557 = vmax.f32 %v1531, 0.0
      %v1558 = vmax.f32 %v1536, 0.0
      %v1559 = vmax.f32 %v1541, 0.0
      %v1560 = vmax.f32 %v1546, 0.0
      %v1561 = vmax.f32 %v1551, 0.0
      %v1562 = vld [vmem:[%s3 + $0x108] sm:$0xff]
      %v1563 = vld [vmem:[%s3 + $0x110] sm:$0xff]
      %v1564 = vld [vmem:[%s3 + $0x118] sm:$0xff]
      %v1565 = vld [vmem:[%s3 + $0x120] sm:$0xff]
      %v1566 = vld [vmem:[%s3 + $0x128] sm:$0xff]
      %v1567 = vld [vmem:[%s3 + $0x130] sm:$0xff]
      %v1568 = vld [vmem:[%s3 + $0x138] sm:$0xff]
      %v1569 = vld [vmem:[%s3 + $0x140] sm:$0xff]
      %v1570 = vld [vmem:[%s3 + $0x148] sm:$0x1]
      %v1571 = vlaneseq
      %v1572 = vshrl.u32 %v1571, 7
      %v1573 = vsub.s32 0, %v1572
      %v1574 = vrot.slane %v1570, %v1573
      %v1576 = vsel %vm564, %v1554, 0
      %v1579 = vsel %vm564, %v1555, 0
      %v1582 = vsel %vm564, %v1556, 0
      %v1585 = vsel %vm564, %v1557, 0
      %v1588 = vsel %vm564, %v1558, 0
      %v1591 = vsel %vm564, %v1559, 0
      %v1594 = vsel %vm564, %v1560, 0
      %v1597 = vsel %vm564, %v1561, 0
      %1599 = vmatprep.subr.mxu0 0.0
      %1600 = vmatpush1.msra.mxu0 %v1562
      %1601 = vmatprep.subr.mxu0 0.0
      %1602 = vmatpush1.msra.mxu0 %v1563
      %1603 = vmatprep.subr.mxu0 0.0
      %1604 = vmatpush1.msra.mxu0 %v1564
      %1605 = vmatprep.subr.mxu0 0.0
      %1606 = vmatpush1.msra.mxu0 %v1565
      %1607 = vmatprep.subr.mxu0 0.0
      %1608 = vmatpush1.msra.mxu0 %v1566
      %1609 = vmatprep.subr.mxu0 0.0
      %1610 = vmatpush1.msra.mxu0 %v1567
      %1611 = vmatprep.subr.mxu0 0.0
      %1612 = vmatpush1.msra.mxu0 %v1568
      %1613 = vmatprep.subr.mxu0 0.0
      %1614 = vmatpush1.msra.mxu0 %v1569
      %1615 = vmatprep.subr.mxu0 0.0
      %1616 = vmatpush1.msra.mxu0 0.0
      %1617 = vmatprep.subr.mxu0 0.0
      %1618 = vmatpush1.msra.mxu0 0.0
      %1619 = vmatprep.subr.mxu0 0.0
      %1620 = vmatpush1.msra.mxu0 0.0
      %1621 = vmatprep.subr.mxu0 0.0
      %1622 = vmatpush1.msra.mxu0 0.0
      %1623 = vmatprep.subr.mxu0 0.0
      %1624 = vmatpush1.msra.mxu0 0.0
      %1625 = vmatprep.subr.mxu0 0.0
      %1626 = vmatpush1.msra.mxu0 0.0
      %1627 = vmatprep.subr.mxu0 0.0
      %1628 = vmatpush1.msra.mxu0 0.0
      %1629 = vmatprep.subr.mxu0 0.0
      %1630 = vmatpush1.msra.mxu0 0.0
      %1631 = vmatprep.subr.mxu0 0.0
      %1632 = vmatpush1.msra.mxu0 0.0
      %1633 = vmatprep.subr.mxu0 0.0
      %1634 = vmatpush1.msra.mxu0 0.0
      %1635 = vmatprep.subr.mxu0 0.0
      %1636 = vmatpush1.msra.mxu0 0.0
      %1637 = vmatprep.subr.mxu0 0.0
      %1638 = vmatpush1.msra.mxu0 0.0
      %1639 = vmatprep.subr.mxu0 0.0
      %1640 = vmatpush1.msra.mxu0 0.0
      %1641 = vmatprep.subr.mxu0 0.0
      %1642 = vmatpush1.msra.mxu0 0.0
      %1643 = vmatprep.subr.mxu0 0.0
      %1644 = vmatpush1.msra.mxu0 0.0
      %1645 = vmatprep.subr.mxu0 0.0
      %1646 = vmatpush1.msra.mxu0 0.0
      %1647 = vmatprep.subr.mxu0 0.0
      %1648 = vmatpush1.msra.mxu0 0.0
      %1649 = vmatprep.subr.mxu0 0.0
      %1650 = vmatpush1.msra.mxu0 0.0
      %1651 = vmatprep.subr.mxu0 0.0
      %1652 = vmatpush1.msra.mxu0 0.0
      %1653 = vmatprep.subr.mxu0 0.0
      %1654 = vmatpush1.msra.mxu0 0.0
      %1655 = vmatprep.subr.mxu0 0.0
      %1656 = vmatpush1.msra.mxu0 0.0
      %1657 = vmatprep.subr.mxu0 0.0
      %1658 = vmatpush1.msra.mxu0 0.0
      %1659 = vmatprep.subr.mxu0 0.0
      %1660 = vmatpush1.msra.mxu0 0.0
      %1661 = vmatprep.subr.mxu0 0.0
      %1662 = vmatpush1.msra.mxu0 0.0
      %1663 = vmatprep.mubr.f32.mxu0 0.0
      %1664 = vmatmul.mubr.f32.gmra.mrb[0].mxu0 %v1576
      %v1665 = vpop.f32.mrb[0].mxu0
      %v1666 = vadd.f32 %v1574, %v1665
      %v1667 = vpop.f32.mrb[0].mxu0
      %1668 = vmatprep.mubr.f32.mxu0 0.0
      %1669 = vmatmul.mubr.f32.gmra.mrb[0].mxu0 %v1579
      %v1670 = vpop.f32.mrb[0].mxu0
      %v1671 = vadd.f32 %v1574, %v1670
      %v1672 = vpop.f32.mrb[0].mxu0
      %1673 = vmatprep.mubr.f32.mxu0 0.0
      %1674 = vmatmul.mubr.f32.gmra.mrb[0].mxu0 %v1582
      %v1675 = vpop.f32.mrb[0].mxu0
      %v1676 = vadd.f32 %v1574, %v1675
      %v1677 = vpop.f32.mrb[0].mxu0
      %1678 = vmatprep.mubr.f32.mxu0 0.0
      %1679 = vmatmul.mubr.f32.gmra.mrb[0].mxu0 %v1585
      %v1680 = vpop.f32.mrb[0].mxu0
      %v1681 = vadd.f32 %v1574, %v1680
      %v1682 = vpop.f32.mrb[0].mxu0
      %1683 = vmatprep.mubr.f32.mxu0 0.0
      %1684 = vmatmul.mubr.f32.gmra.mrb[0].mxu0 %v1588
      %v1685 = vpop.f32.mrb[0].mxu0
      %v1686 = vadd.f32 %v1574, %v1685
      %v1687 = vpop.f32.mrb[0].mxu0
      %1688 = vmatprep.mubr.f32.mxu0 0.0
      %1689 = vmatmul.mubr.f32.gmra.mrb[0].mxu0 %v1591
      %v1690 = vpop.f32.mrb[0].mxu0
      %v1691 = vadd.f32 %v1574, %v1690
      %v1692 = vpop.f32.mrb[0].mxu0
      %1693 = vmatprep.mubr.f32.mxu0 0.0
      %1694 = vmatmul.mubr.f32.gmra.mrb[0].mxu0 %v1594
      %v1695 = vpop.f32.mrb[0].mxu0
      %v1696 = vadd.f32 %v1574, %v1695
      %v1697 = vpop.f32.mrb[0].mxu0
      %1698 = vmatprep.mubr.f32.mxu0 0.0
      %1699 = vmatmul.mubr.f32.gmra.mrb[0].mxu0 %v1597
      %v1700 = vpop.f32.mrb[0].mxu0
      %v1701 = vadd.f32 %v1574, %v1700
      %v1702 = vpop.f32.mrb[0].mxu0
      %1703 = vdwg.mxu0
      %1712 = vrot.lane.b32.xlu0 %v1666, 8
      %v1713 = vpop.permute.xlu0 %1712
      %1714 = vrot.lane.b32.xlu0 %v1671, 8
      %v1715 = vpop.permute.xlu0 %1714
      %1716 = vrot.lane.b32.xlu0 %v1676, 8
      %v1717 = vpop.permute.xlu0 %1716
      %1718 = vrot.lane.b32.xlu0 %v1681, 8
      %v1719 = vpop.permute.xlu0 %1718
      %1720 = vrot.lane.b32.xlu0 %v1686, 8
      %v1721 = vpop.permute.xlu0 %1720
      %1722 = vrot.lane.b32.xlu0 %v1691, 8
      %v1723 = vpop.permute.xlu0 %1722
      %1724 = vrot.lane.b32.xlu0 %v1696, 8
      %v1725 = vpop.permute.xlu0 %1724
      %1726 = vrot.lane.b32.xlu0 %v1701, 8
      %v1727 = vpop.permute.xlu0 %1726
      %v1736 = vsub.f32 %v932, %v1713
      %v1737 = vsub.f32 %v933, %v1715
      %v1738 = vsub.f32 %v934, %v1717
      %v1739 = vsub.f32 %v935, %v1719
      %v1740 = vsub.f32 %v936, %v1721
      %v1741 = vsub.f32 %v937, %v1723
      %v1742 = vsub.f32 %v938, %v1725
      %v1743 = vsub.f32 %v939, %v1727
      %v1744 = vsub.f32 0.0, %v1666
      %v1745 = vsub.f32 0.0, %v1671
      %v1746 = vsub.f32 0.0, %v1676
      %v1747 = vsub.f32 0.0, %v1681
      %v1748 = vsub.f32 0.0, %v1686
      %v1749 = vsub.f32 0.0, %v1691
      %v1750 = vsub.f32 0.0, %v1696
      %v1751 = vsub.f32 0.0, %v1701
      %v1752 = vmul.f32 %v1744, 1.442695
      %v1753 = vpow.pop %v1752
      %v1754 = vmul.f32 %v1745, 1.442695
      %v1755 = vpow.pop %v1754
      %v1756 = vmul.f32 %v1746, 1.442695
      %v1757 = vpow.pop %v1756
      %v1758 = vmul.f32 %v1747, 1.442695
      %v1759 = vpow.pop %v1758
      %v1760 = vmul.f32 %v1748, 1.442695
      %v1761 = vpow.pop %v1760
      %v1762 = vmul.f32 %v1749, 1.442695
      %v1763 = vpow.pop %v1762
      %v1764 = vmul.f32 %v1750, 1.442695
      %v1765 = vpow.pop %v1764
      %v1766 = vmul.f32 %v1751, 1.442695
      %v1767 = vpow.pop %v1766
      %v1768 = vmul.f32 %v1736, %v1753
      %v1769 = vmul.f32 %v1737, %v1755
      %v1770 = vmul.f32 %v1738, %v1757
      %v1771 = vmul.f32 %v1739, %v1759
      %v1772 = vmul.f32 %v1740, %v1761
      %v1773 = vmul.f32 %v1741, %v1763
      %v1774 = vmul.f32 %v1742, %v1765
      %v1775 = vmul.f32 %v1743, %v1767
      %1776 = vrot.lane.b32.xlu0 %v806, 120
      %v1777 = vpop.permute.xlu0 %1776
      %1778 = vrot.lane.b32.xlu0 %v811, 120
      %v1779 = vpop.permute.xlu0 %1778
      %1780 = vrot.lane.b32.xlu0 %v816, 120
      %v1781 = vpop.permute.xlu0 %1780
      %1782 = vrot.lane.b32.xlu0 %v821, 120
      %v1783 = vpop.permute.xlu0 %1782
      %1784 = vrot.lane.b32.xlu0 %v826, 120
      %v1785 = vpop.permute.xlu0 %1784
      %1786 = vrot.lane.b32.xlu0 %v831, 120
      %v1787 = vpop.permute.xlu0 %1786
      %1788 = vrot.lane.b32.xlu0 %v836, 120
      %v1789 = vpop.permute.xlu0 %1788
      %1790 = vrot.lane.b32.xlu0 %v841, 120
      %v1791 = vpop.permute.xlu0 %1790
      %v1800 = vadd.f32 %v1053, %v1777
      %v1801 = vadd.f32 %v1058, %v1779
      %v1802 = vadd.f32 %v1063, %v1781
      %v1803 = vadd.f32 %v1068, %v1783
      %v1804 = vadd.f32 %v1073, %v1785
      %v1805 = vadd.f32 %v1078, %v1787
      %v1806 = vadd.f32 %v1083, %v1789
      %v1807 = vadd.f32 %v1088, %v1791
      %1808 = vrot.lane.b32.xlu0 %v1666, 120
      %v1809 = vpop.permute.xlu0 %1808
      %1810 = vrot.lane.b32.xlu0 %v1671, 120
      %v1811 = vpop.permute.xlu0 %1810
      %1812 = vrot.lane.b32.xlu0 %v1676, 120
      %v1813 = vpop.permute.xlu0 %1812
      %1814 = vrot.lane.b32.xlu0 %v1681, 120
      %v1815 = vpop.permute.xlu0 %1814
      %1816 = vrot.lane.b32.xlu0 %v1686, 120
      %v1817 = vpop.permute.xlu0 %1816
      %1818 = vrot.lane.b32.xlu0 %v1691, 120
      %v1819 = vpop.permute.xlu0 %1818
      %1820 = vrot.lane.b32.xlu0 %v1696, 120
      %v1821 = vpop.permute.xlu0 %1820
      %1822 = vrot.lane.b32.xlu0 %v1701, 120
      %v1823 = vpop.permute.xlu0 %1822
      %v1832 = vsub.f32 %v1800, %v1809
      %v1833 = vsub.f32 %v1801, %v1811
      %v1834 = vsub.f32 %v1802, %v1813
      %v1835 = vsub.f32 %v1803, %v1815
      %v1836 = vsub.f32 %v1804, %v1817
      %v1837 = vsub.f32 %v1805, %v1819
      %v1838 = vsub.f32 %v1806, %v1821
      %v1839 = vsub.f32 %v1807, %v1823
      %v1840 = vmul.f32 %v261, %v261
      %v1841 = vmul.f32 %v262, %v262
      %v1842 = vmul.f32 %v263, %v263
      %v1843 = vmul.f32 %v264, %v264
      %v1844 = vmul.f32 %v265, %v265
      %v1845 = vmul.f32 %v266, %v266
      %v1846 = vmul.f32 %v267, %v267
      %v1847 = vmul.f32 %v268, %v268
      %v1848 = vmul.f32 %v1840, 0.5
      %v1849 = vmul.f32 %v1841, 0.5
      %v1850 = vmul.f32 %v1842, 0.5
      %v1851 = vmul.f32 %v1843, 0.5
      %v1852 = vmul.f32 %v1844, 0.5
      %v1853 = vmul.f32 %v1845, 0.5
      %v1854 = vmul.f32 %v1846, 0.5
      %v1855 = vmul.f32 %v1847, 0.5
      %v1856 = vadd.f32 %v1832, %v1848
      %v1857 = vadd.f32 %v1833, %v1849
      %v1858 = vadd.f32 %v1834, %v1850
      %v1859 = vadd.f32 %v1835, %v1851
      %v1860 = vadd.f32 %v1836, %v1852
      %v1861 = vadd.f32 %v1837, %v1853
      %v1862 = vadd.f32 %v1838, %v1854
      %v1863 = vadd.f32 %v1839, %v1855
      %v1864 = vmul.f32 %v1768, %v1768
      %v1865 = vmul.f32 %v1769, %v1769
      %v1866 = vmul.f32 %v1770, %v1770
      %v1867 = vmul.f32 %v1771, %v1771
      %v1868 = vmul.f32 %v1772, %v1772
      %v1869 = vmul.f32 %v1773, %v1773
      %v1870 = vmul.f32 %v1774, %v1774
      %v1871 = vmul.f32 %v1775, %v1775
      %v1872 = vmul.f32 %v1864, 0.5
      %v1873 = vmul.f32 %v1865, 0.5
      %v1874 = vmul.f32 %v1866, 0.5
      %v1875 = vmul.f32 %v1867, 0.5
      %v1876 = vmul.f32 %v1868, 0.5
      %v1877 = vmul.f32 %v1869, 0.5
      %v1878 = vmul.f32 %v1870, 0.5
      %v1879 = vmul.f32 %v1871, 0.5
      %1888 = vrot.lane.b32.xlu0 %v1872, 120
      %v1889 = vpop.permute.xlu0 %1888
      %1890 = vrot.lane.b32.xlu0 %v1873, 120
      %v1891 = vpop.permute.xlu0 %1890
      %1892 = vrot.lane.b32.xlu0 %v1874, 120
      %v1893 = vpop.permute.xlu0 %1892
      %1894 = vrot.lane.b32.xlu0 %v1875, 120
      %v1895 = vpop.permute.xlu0 %1894
      %1896 = vrot.lane.b32.xlu0 %v1876, 120
      %v1897 = vpop.permute.xlu0 %1896
      %1898 = vrot.lane.b32.xlu0 %v1877, 120
      %v1899 = vpop.permute.xlu0 %1898
      %1900 = vrot.lane.b32.xlu0 %v1878, 120
      %v1901 = vpop.permute.xlu0 %1900
      %1902 = vrot.lane.b32.xlu0 %v1879, 120
      %v1903 = vpop.permute.xlu0 %1902
      %v1912 = vsub.f32 %v1856, %v1889
      %v1913 = vsub.f32 %v1857, %v1891
      %v1914 = vsub.f32 %v1858, %v1893
      %v1915 = vsub.f32 %v1859, %v1895
      %v1916 = vsub.f32 %v1860, %v1897
      %v1917 = vsub.f32 %v1861, %v1899
      %v1918 = vsub.f32 %v1862, %v1901
      %v1919 = vsub.f32 %v1863, %v1903
      %v1920 = vsel %vm271, %v1912, 0.0
      %1921 = vadd.xlane.f32.xlu0 %v1920
      %v1922 = vpop.xlane.xlu0 %1921
      %v1923 = vsel %vm271, %v1913, 0.0
      %1924 = vadd.xlane.f32.xlu0 %v1923
      %v1925 = vpop.xlane.xlu0 %1924
      %v1926 = vsel %vm271, %v1914, 0.0
      %1927 = vadd.xlane.f32.xlu0 %v1926
      %v1928 = vpop.xlane.xlu0 %1927
      %v1929 = vsel %vm271, %v1915, 0.0
      %1930 = vadd.xlane.f32.xlu0 %v1929
      %v1931 = vpop.xlane.xlu0 %1930
      %v1932 = vsel %vm271, %v1916, 0.0
      %1933 = vadd.xlane.f32.xlu0 %v1932
      %v1934 = vpop.xlane.xlu0 %1933
      %v1935 = vsel %vm271, %v1917, 0.0
      %1936 = vadd.xlane.f32.xlu0 %v1935
      %v1937 = vpop.xlane.xlu0 %1936
      %v1938 = vsel %vm271, %v1918, 0.0
      %1939 = vadd.xlane.f32.xlu0 %v1938
      %v1940 = vpop.xlane.xlu0 %1939
      %v1941 = vsel %vm271, %v1919, 0.0
      %1942 = vadd.xlane.f32.xlu0 %v1941
      %v1943 = vpop.xlane.xlu0 %1942
      %1944 = vst.msk [vmem:[%s243] sm:$0xff] %vm271, %v1147
      %1945 = vst.msk [vmem:[%s243 + $0x8] sm:$0xff] %vm271, %v1148
      %1946 = vst.msk [vmem:[%s243 + $0x10] sm:$0xff] %vm271, %v1149
      %1947 = vst.msk [vmem:[%s243 + $0x18] sm:$0xff] %vm271, %v1150
      %1948 = vst.msk [vmem:[%s243 + $0x20] sm:$0xff] %vm271, %v1151
      %1949 = vst.msk [vmem:[%s243 + $0x28] sm:$0xff] %vm271, %v1152
      %1950 = vst.msk [vmem:[%s243 + $0x30] sm:$0xff] %vm271, %v1153
      %1951 = vst.msk [vmem:[%s243 + $0x38] sm:$0xff] %vm271, %v1154
      %vm1952 = vcmask 130112
      %1953 = vst.msk [vmem:[%s243] sm:$0xff] %vm1952, %v1922
      %1954 = vst.msk [vmem:[%s243 + $0x8] sm:$0xff] %vm1952, %v1925
      %1955 = vst.msk [vmem:[%s243 + $0x10] sm:$0xff] %vm1952, %v1928
      %1956 = vst.msk [vmem:[%s243 + $0x18] sm:$0xff] %vm1952, %v1931
      %1957 = vst.msk [vmem:[%s243 + $0x20] sm:$0xff] %vm1952, %v1934
      %1958 = vst.msk [vmem:[%s243 + $0x28] sm:$0xff] %vm1952, %v1937
      %1959 = vst.msk [vmem:[%s243 + $0x30] sm:$0xff] %vm1952, %v1940
      %1960 = vst.msk [vmem:[%s243 + $0x38] sm:$0xff] %vm1952, %v1943
      %s1961 = smul.u32 8, %s15
      %p1962 = scmp.lt.s32.totalorder %s1961, 15
      %s1963 = scalar_select %p1962, %s1961, 15
      %s1964 = smul.addr %s1963, 8
      %s1965 = scalar_lea.vmem %s4, %s1964
      // Predicated region
      $region37: #{tpu_custom_call.1} parent=35 // pred_check
        %p1966 = pneg %p132
      $region38: #{tpu_custom_call.1} parent=35 // pred_check_branch
        %1968 = sbr.rel (%p1966) target = $region40
      $region39: #{tpu_custom_call.1} parent=35 // pred_region
        %s1969 = smul.u32 8, %s15
      $region40: #{tpu_custom_call.1} parent=35 // pred_fallthru
        _
    $region36: #{tpu_custom_call.1} parent=5 // pred_fallthru
      _
    %p1970 = scmp.le.s32.totalorder 2, %s10
    // Predicated region
    $region41: #{tpu_custom_call.1} parent=5 // pred_check
      %p1971 = pneg %p1970
    $region42: #{tpu_custom_call.1} parent=5 // pred_check_branch
      %1973 = sbr.rel (%p1971) target = $region44
    $region43: #{tpu_custom_call.1} parent=5 // pred_region
      %s1974 = ssub.s32 %s10, 2
      // Predicated region
      $region45: #{tpu_custom_call.1} parent=43 // pred_check
        %p1975 = pneg %p138
      $region46: #{tpu_custom_call.1} parent=43 // pred_check_branch
        %1977 = sbr.rel (%p1975) target = $region48
      $region47: #{tpu_custom_call.1} parent=43 // pred_region
        %s1978 = smul.u32 8, %s16
        %p1979 = scmp.lt.s32.totalorder %s1978, 15
        %s1980 = scalar_select %p1979, %s1978, 15
        %s1981 = smul.addr %s1980, 8
        %s1982 = scalar_lea.vmem %s4, %s1981
      $region48: #{tpu_custom_call.1} parent=43 // pred_fallthru
        _
    $region44: #{tpu_custom_call.1} parent=5 // pred_fallthru
      _
  $region6: #{tpu_custom_call.1} parent=0 // loop_footer
    %s14 = sadd.s32 1, %s10
  $region7: #{tpu_custom_call.1} parent=0 // loop_footer_branch
    %9 = sbr.rel target = $region3
  $region8: #{tpu_custom_call.1} parent=0 // loop_exit
    _

</llo_original>
